<compile_context>
chip_gen: v7x
topology: tpu7x:2x2x1
jax: 0.10.0
libtpu: 0.0.40
codegen_flags: <defaults>
</compile_context>

<pallas_src>
import functools

import jax
import jax.numpy as jnp
from jax import lax
from jax.experimental import pallas as pl
from jax.experimental.pallas import tpu as pltpu

# -------------------- reduced model configuration --------------------
SMALL = True
CLASSES = 19
IN_SIZE = (32, 32)
NUM_INIT = 32
K_R = 48
GROUPS = 4
K_SEC = (1, 1, 2, 1)
INC_SEC = (8, 8, 8, 16)
OUT_SEC = (64, 48, 32)
DIL_SEC = (1, 1, 1, 2, 4)
ASPP_SEC = (7, 14, 21)

LEAKY_SLOPE = 0.01
ACT_DTYPE = jnp.bfloat16          # activation / writeback dtype (MXU feed dtype)


def _round_up(x, m):
    return -(-x // m) * m


def _pick_m_tile(M):
    """Row tile for matmuls; avoids padded HBM copies where possible."""
    if M % 256 == 0:
        return min(256, M), M
    if M % 128 == 0:
        return 128, M
    if M <= 256:
        t = _round_up(M, 8)
        return t, t
    return 128, _round_up(M, 128)


def _pick_row_tile(M, cap=512):
    """Row tile for elementwise kernels (tiles are full-dim or >=128-multiples)."""
    if M <= cap:
        t = _round_up(M, 8)
        return t, t
    if M % cap == 0:
        return cap, M
    return cap, _round_up(M, cap)


def _abn_scale_shift(bn, eps=1e-5):
    s = bn["gamma"] * lax.rsqrt(bn["var"] + eps)
    t = bn["beta"] - bn["mean"] * s
    return s.astype(jnp.float32), t.astype(jnp.float32)


# ============================ fused matmul kernel ============================
#   A'  = [leaky](A * in_scale + in_shift)        (fused pre-conv ABN, optional)
#   ACC = A'(bf16) @ B(bf16)                      (MXU, f32 accumulation)
#   O   = [leaky](ACC * out_scale + out_shift)    (fused post-conv ABN / bias)
# Prologue / epilogue are compiled away (and their side inputs dropped) when
# the corresponding scale/shift arguments are None.

@functools.partial(jax.jit,
                   static_argnames=("pre_act", "post_act", "slope", "tm", "tn", "tk"))
def _fused_mm(a, b, isc, ish, osc, osh, *, pre_act, post_act, slope, tm, tn, tk):
    Mp, Kp = a.shape
    _, Ncols = b.shape
    has_in = isc is not None
    has_out = osc is not None
    grid = (Mp // tm, Ncols // tn, Kp // tk)

    def kernel(*refs):
        idx = 2
        a_ref, b_ref = refs[0], refs[1]
        if has_in:
            isc_ref, ish_ref = refs[idx], refs[idx + 1]
            idx += 2
        if has_out:
            osc_ref, osh_ref = refs[idx], refs[idx + 1]
            idx += 2
        o_ref, acc_ref = refs[idx], refs[idx + 1]

        kk = pl.program_id(2)

        @pl.when(kk == 0)
        def _():
            acc_ref[...] = jnp.zeros_like(acc_ref)

        av = a_ref[...]
        if has_in:
            af = av.astype(jnp.float32) * isc_ref[...] + ish_ref[...]
            if pre_act:
                af = jnp.where(af >= 0, af, slope * af)
            av = af.astype(jnp.bfloat16)
        acc_ref[...] += jnp.dot(av, b_ref[...], preferred_element_type=jnp.float32)

        @pl.when(kk == pl.num_programs(2) - 1)
        def _():
            y = acc_ref[...]
            if has_out:
                y = y * osc_ref[...] + osh_ref[...]
            if post_act:
                y = jnp.where(y >= 0, y, slope * y)
            o_ref[...] = y.astype(o_ref.dtype)

    in_specs = [pl.BlockSpec((tm, tk), lambda i, j, k: (i, k)),
                pl.BlockSpec((tk, tn), lambda i, j, k: (k, j))]
    inputs = [a, b]
    if has_in:
        in_specs += [pl.BlockSpec((1, tk), lambda i, j, k: (0, k))] * 2
        inputs += [isc, ish]
    if has_out:
        in_specs += [pl.BlockSpec((1, tn), lambda i, j, k: (0, j))] * 2
        inputs += [osc, osh]

    return pl.pallas_call(
        kernel,
        out_shape=jax.ShapeDtypeStruct((Mp, Ncols), ACT_DTYPE),
        grid_spec=pltpu.PrefetchScalarGridSpec(
            num_scalar_prefetch=0,
            grid=grid,
            in_specs=in_specs,
            out_specs=pl.BlockSpec((tm, tn), lambda i, j, k: (i, j)),
            scratch_shapes=[pltpu.VMEM((tm, tn), jnp.float32)]),
        compiler_params=pltpu.CompilerParams(
            dimension_semantics=("parallel", "parallel", "arbitrary"),
            vmem_limit_bytes=64 * 1024 * 1024),
    )(*inputs)


# ============================ elementwise kernels ============================

def _bn_act_kernel(x_ref, s_ref, t_ref, o_ref, *, slope):
    y = x_ref[...].astype(jnp.float32) * s_ref[...] + t_ref[...]
    o_ref[...] = jnp.where(y >= 0, y, slope * y).astype(o_ref.dtype)


@functools.partial(jax.jit, static_argnames=("slope", "tm"))
def _bn_act_2d(x, s, t, *, slope, tm):
    M, C = x.shape
    return pl.pallas_call(
        functools.partial(_bn_act_kernel, slope=slope),
        out_shape=jax.ShapeDtypeStruct((M, C), ACT_DTYPE),
        grid=(M // tm,),
        in_specs=[pl.BlockSpec((tm, C), lambda i: (i, 0)),
                  pl.BlockSpec((1, C), lambda i: (0, 0)),
                  pl.BlockSpec((1, C), lambda i: (0, 0))],
        out_specs=pl.BlockSpec((tm, C), lambda i: (i, 0)),
        compiler_params=pltpu.CompilerParams(dimension_semantics=("parallel",)),
    )(x, s, t)


def batch_norm_act(x, bn, slope=LEAKY_SLOPE):
    """Standalone InPlaceABN (eval): BN(running stats) + LeakyReLU, row-tiled."""
    N, H, W, C = x.shape
    s, t = _abn_scale_shift(bn)
    M = N * H * W
    tm, Mp = _pick_row_tile(M)
    xf = x.reshape(M, C).astype(ACT_DTYPE)
    if Mp != M:
        xf = jnp.pad(xf, ((0, Mp - M), (0, 0)))
    y = _bn_act_2d(xf, s.reshape(1, C), t.reshape(1, C), slope=float(slope), tm=tm)
    return y[:M].reshape(N, H, W, C)


def _gap_kernel(x_ref, o_ref):
    o_ref[...] = jnp.mean(x_ref[...].astype(jnp.float32), axis=1, keepdims=True)


@jax.jit
def _gap(x):
    N, HW, C = x.shape
    return pl.pallas_call(
        _gap_kernel,
        out_shape=jax.ShapeDtypeStruct((N, 1, C), jnp.float32),
        grid=(N,),
        in_specs=[pl.BlockSpec((1, HW, C), lambda i: (i, 0, 0))],
        out_specs=pl.BlockSpec((1, 1, C), lambda i: (i, 0, 0)),
        compiler_params=pltpu.CompilerParams(dimension_semantics=("parallel",)),
    )(x)


def global_avg_pool(x):
    N, H, W, C = x.shape
    return _gap(x.reshape(N, H * W, C)).reshape(N, C)


def _scale_kernel(x_ref, g_ref, o_ref):
    o_ref[...] = (x_ref[...].astype(jnp.float32) * g_ref[...]).astype(o_ref.dtype)


@functools.partial(jax.jit, static_argnames=("thw",))
def _scale(x, g, *, thw):
    N, HWp, C = x.shape
    return pl.pallas_call(
        _scale_kernel,
        out_shape=jax.ShapeDtypeStruct((N, HWp, C), ACT_DTYPE),
        grid=(N, HWp // thw),
        in_specs=[pl.BlockSpec((1, thw, C), lambda n, i: (n, i, 0)),
                  pl.BlockSpec((1, 1, C), lambda n, i: (n, 0, 0))],
        out_specs=pl.BlockSpec((1, thw, C), lambda n, i: (n, i, 0)),
        compiler_params=pltpu.CompilerParams(
            dimension_semantics=("parallel", "parallel")),
    )(x, g)


def _max3_kernel(a_ref, b_ref, c_ref, o_ref):
    o_ref[...] = jnp.maximum(jnp.maximum(a_ref[...], b_ref[...]), c_ref[...])


@functools.partial(jax.jit, static_argnames=("tm",))
def _max3(a, b, c, *, tm):
    M, C = a.shape
    return pl.pallas_call(
        _max3_kernel,
        out_shape=jax.ShapeDtypeStruct((M, C), a.dtype),
        grid=(M // tm,),
        in_specs=[pl.BlockSpec((tm, C), lambda i: (i, 0))] * 3,
        out_specs=pl.BlockSpec((tm, C), lambda i: (i, 0)),
        compiler_params=pltpu.CompilerParams(dimension_semantics=("parallel",)),
    )(a, b, c)


def fused_max3(a, b, c):
    """Elementwise max of three equal-shape arrays, flattened to a lane-dense
    (rows, 128) layout so the stores are unmasked (C=19 would otherwise give
    masked partial stores)."""
    shape = a.shape
    n = a.size
    rows = _round_up(pl.cdiv(n, 128), 16)       # 16: bf16 sublane packing
    tm, rows_p = _pick_row_tile(rows)
    pad = rows_p * 128 - n

    def prep(v):
        return jnp.pad(v.reshape(-1), (0, pad)).reshape(rows_p, 128)

    out = _max3(prep(a), prep(b), prep(c), tm=tm)
    return out.reshape(-1)[:n].reshape(shape)


# ============================ convolution (fused) ============================

def _tap_slice(x, i0, j0, stride, OH, OW):
    """Slice of x for one conv tap (output index o maps to source i0 + stride*o),
    zero-filled out of bounds.  Returns None if the tap is entirely padding."""
    N, H, W, C = x.shape

    def orange(start, size, limit):
        o_lo = 0 if start >= 0 else (-start + stride - 1) // stride
        o_hi = (limit - start + stride - 1) // stride
        o_hi = min(size, max(0, o_hi))
        o_lo = min(o_lo, o_hi)
        return o_lo, o_hi

    r_lo, r_hi = orange(i0, OH, H)
    c_lo, c_hi = orange(j0, OW, W)
    if r_lo >= r_hi or c_lo >= c_hi:
        return None
    rs = i0 + stride * r_lo
    cs = j0 + stride * c_lo
    core = x[:, rs:rs + (r_hi - r_lo - 1) * stride + 1:stride,
             cs:cs + (c_hi - c_lo - 1) * stride + 1:stride, :]
    return jnp.pad(core, ((0, 0), (r_lo, OH - r_hi), (c_lo, OW - c_hi), (0, 0)))


def conv2d(x, w, *, stride=1, padding=0, dilation=1, groups=1, bias=None,
           in_bn=None, pre_act=False, out_bn=None, post_act=False,
           slope=LEAKY_SLOPE):
    """NHWC conv; w is [KH,KW,Cin//groups,Cout].  A single fused Pallas matmul
    (grouped convs become one block-diagonal matmul -> output already in
    PyTorch's group-major order), with optional fused ABN prologue / epilogue
    and lane-padding of small Cout to 128 for unmasked stores."""
    # pre_act without in_bn would LeakyReLU raw (un-normalized) input.
    assert in_bn is not None or not pre_act
    # Prologue fusion only valid for pad-free convs (zeros must stay zeros).
    assert in_bn is None or padding == 0

    N, H, W_, Cin = x.shape
    KH, KW, Cg, Cout = w.shape
    assert Cg * groups == Cin and Cout % groups == 0
    OH = (H + 2 * padding - dilation * (KH - 1) - 1) // stride + 1
    OW = (W_ + 2 * padding - dilation * (KW - 1) - 1) // stride + 1
    cout_g = Cout // groups
    M = N * OH * OW

    xb = x.astype(ACT_DTYPE)

    # Gather taps; taps lying entirely in the zero padding contribute nothing
    # and are dropped (the huge-dilation ASPP branches collapse to the centre).
    taps = []
    for ki in range(KH):
        for kj in range(KW):
            sl = _tap_slice(xb, ki * dilation - padding, kj * dilation - padding,
                            stride, OH, OW)
            if sl is not None:
                taps.append(((ki, kj), sl))
    n_taps = len(taps)
    assert n_taps >= 1
    K = n_taps * Cin

    # A: (M, K) bf16; column index = tap*Cin + channel (no per-group split).
    if n_taps == 1:
        A = taps[0][1].reshape(M, K)
    else:
        A = jnp.concatenate([s for _, s in taps], axis=-1).reshape(M, K)

    # B: (K, Cout) bf16.  Grouped convs -> block-diagonal weights; output
    # channels come out group-major, matching PyTorch grouped-conv ordering.
    w_taps = jnp.stack([w[ki, kj] for (ki, kj), _ in taps], axis=0)  # (T, Cg, Cout)
    if groups == 1:
        B = w_taps.reshape(K, Cout)
    else:
        Bfull = jnp.zeros((n_taps, Cin, Cout), jnp.float32)
        for g in range(groups):
            Bfull = Bfull.at[:, g * Cg:(g + 1) * Cg,
                             g * cout_g:(g + 1) * cout_g].set(
                w_taps[:, :, g * cout_g:(g + 1) * cout_g])
        B = Bfull.reshape(K, Cout)
    B = B.astype(jnp.bfloat16)

    # prologue scale/shift per input column (None -> compiled away)
    if in_bn is not None:
        s_c, t_c = _abn_scale_shift(in_bn)
        isc = jnp.tile(s_c, n_taps).reshape(1, K)
        ish = jnp.tile(t_c, n_taps).reshape(1, K)
    else:
        isc = ish = None

    # epilogue scale/shift per output column (None -> compiled away)
    has_out = (out_bn is not None) or (bias is not None)
    if has_out:
        if out_bn is not None:
            osc_c, osh_c = _abn_scale_shift(out_bn)
        else:
            osc_c = jnp.ones((Cout,), jnp.float32)
            osh_c = jnp.zeros((Cout,), jnp.float32)
        if bias is not None:
            osh_c = osh_c + osc_c * bias.astype(jnp.float32)
    else:
        osc_c = osh_c = None

    # lane-dense output: pad small Cout to 128 (unmasked stores), slice after.
    Ncols = Cout
    if Ncols < 128:
        Ncols = 128
        B = jnp.pad(B, ((0, 0), (0, 128 - Cout)))
        if has_out:
            osc_c = jnp.pad(osc_c, (0, 128 - Cout), constant_values=1.0)
            osh_c = jnp.pad(osh_c, (0, 128 - Cout))
    osc = osc_c.reshape(1, Ncols) if has_out else None
    osh = osh_c.reshape(1, Ncols) if has_out else None

    # tiles: M rounded only to a multiple of 8; N/K use full-dim blocks unless
    # 128-aligned (no zero-padded HBM copies of A along K).
    tm, Mp = _pick_m_tile(M)
    if Mp != M:
        A = jnp.pad(A, ((0, Mp - M), (0, 0)))
    if Ncols % 128 == 0:
        tn = 256 if (Ncols % 256 == 0 and Ncols >= 256) else 128
    else:
        tn = Ncols
    if K % 128 == 0 and K > 1024:
        # cap tk for very large K (keeps v7x's 64 MiB VMEM happy)
        tk = 512 if K % 512 == 0 else (256 if K % 256 == 0 else 128)
    else:
        tk = K

    out = _fused_mm(A, B, isc, ish, osc, osh,
                    pre_act=bool(pre_act), post_act=bool(post_act),
                    slope=float(slope), tm=tm, tn=tn, tk=tk)
    if Mp != M or Ncols != Cout:
        out = out[:M, :Cout]
    return out.reshape(N, OH, OW, Cout)


# ============================ pooling / resize glue ============================

def max_pool_3x3_s2_p1(x):
    return lax.reduce_window(x, jnp.array(-jnp.inf, x.dtype), lax.max,
                             window_dimensions=(1, 3, 3, 1),
                             window_strides=(1, 2, 2, 1),
                             padding=((0, 0), (1, 1), (1, 1), (0, 0)))


def upsample_bilinear(x, size):
    # nn.Upsample(mode='bilinear', align_corners=False) ~ half-pixel bilinear resize.
    N, H, W, C = x.shape
    return jax.image.resize(x, (N, size[0], size[1], C), method="bilinear")


def channel_shuffle(x, groups):
    N, H, W, C = x.shape
    return x.reshape(N, H, W, groups, C // groups).swapaxes(3, 4).reshape(N, H, W, C)


def _shuffle_inverse_perm(c, groups):
    """inv such that  shuffle(x)[i] == x[perm[i]]  and  perm[inv[j]] == j."""
    idx = jnp.arange(c)
    perm = (idx % groups) * (c // groups) + idx // groups
    return jnp.argsort(perm)


# ============================ module pieces ============================

def cat_abn(x, bn):
    x_in = jnp.concatenate(x, axis=-1) if isinstance(x, tuple) else x
    return batch_norm_act(x_in, bn)


def se_block(x, p):
    N, H, W, C = x.shape
    pooled = global_avg_pool(x)                      # Pallas reduction (f32)
    # FC layers act on an [N=2, C<=19] matrix: padding them to MXU tiles would be
    # >90% dead FLOPs, so they stay as plain jnp.dot.
    y = jnp.maximum(jnp.dot(pooled, p["w1"]) + p["b1"], 0.0)
    gate = jax.nn.sigmoid(jnp.dot(y, p["w2"]) + p["b2"])
    HW = H * W
    thw, HWp = _pick_row_tile(HW)
    xf = x.reshape(N, HW, C).astype(ACT_DTYPE)
    if HWp != HW:
        xf = jnp.pad(xf, ((0, 0), (0, HWp - HW), (0, 0)))
    out = _scale(xf, gate.reshape(N, 1, C).astype(jnp.float32), thw=thw)
    return out[:, :HW].reshape(N, H, W, C)


def dpn_block(x, blk):
    p, c1c, groups, dil, btype = (blk["params"], blk["c1c"], blk["groups"],
                                  blk["dil"], blk["type"])
    x_in = jnp.concatenate(x, axis=-1) if isinstance(x, tuple) else x
    stride = 2 if btype == "down" else 1
    if btype in ("proj", "down"):
        # projection path: ABN prologue fused into the 1x1 conv
        x_s = conv2d(x_in, p["proj_w"], stride=stride,
                     in_bn=p["proj_bn"], pre_act=True)
        x_s1, x_s2 = x_s[..., :c1c], x_s[..., c1c:]
    else:
        x_s1, x_s2 = x
    # 1x1 "a": bn1 prologue AND bn2 epilogue fused into one matmul
    t = conv2d(x_in, p["w1"], in_bn=p["bn1"], pre_act=True,
               out_bn=p["bn2"], post_act=True)
    # grouped 3x3 "b" (single block-diagonal matmul; input already activated)
    t = conv2d(t, p["w2"], stride=stride, padding=dil, dilation=dil, groups=groups)
    # ShuffleNet channel shuffle is folded into w3/bn3 at init (weight-side perm)
    # 1x1 "c": (shuffled) bn3 prologue fused
    t = conv2d(t, p["w3"], in_bn=p["bn3"], pre_act=True)
    out1 = x_s1 + t[..., :c1c]
    out2 = jnp.concatenate([x_s2, t[..., c1c:]], axis=-1)
    return (out1, out2)


def aspp_block(x, p, out_chs, feat_res, up_ratio, aspp_sec):
    N, H, W, C = x.shape
    g = global_avg_pool(x)                                     # [N, C] f32
    g = jnp.dot(g, p["w_gap"].reshape(C, out_chs))             # tiny 1x1 on pooled vec
    g = jnp.broadcast_to(g[:, None, None, :].astype(ACT_DTYPE),
                         (N, feat_res[0], feat_res[1], out_chs))
    # At these feature sizes the dilated 3x3 branches collapse to their centre
    # tap (dilation >= H,W) -> batch all four branch convs into ONE lane-dense
    # matmul that reads x once.
    collapse = all(d >= H and d >= W for d in aspp_sec)
    if collapse:
        wb = jnp.concatenate([p["w0"][0, 0], p["w1"][1, 1],
                              p["w2"][1, 1], p["w3"][1, 1]], axis=-1)
        branches = conv2d(x, wb[None, None])                   # (N,H,W,4*out_chs)
    else:
        b0 = conv2d(x, p["w0"])
        b1 = conv2d(x, p["w1"], padding=aspp_sec[0], dilation=aspp_sec[0])
        b2 = conv2d(x, p["w2"], padding=aspp_sec[1], dilation=aspp_sec[1])
        b3 = conv2d(x, p["w3"], padding=aspp_sec[2], dilation=aspp_sec[2])
        branches = jnp.concatenate([b0, b1, b2, b3], axis=-1)
    cat = jnp.concatenate([g, branches], axis=-1)              # 5 * out_chs
    # cat-ABN fused as the prologue of the 1x1 "down" conv (pad-free).
    out = conv2d(cat, p["w_down"], in_bn=p["bn"], pre_act=True)
    up = upsample_bilinear(out, (feat_res[0] * up_ratio, feat_res[1] * up_ratio))
    return out, up


def score_head(x, p, up_size=None):
    t = conv2d(x, p["w"], bias=p["b"])       # bias fused into the matmul epilogue
    t = se_block(t, p["se"])
    if up_size is not None:
        t = upsample_bilinear(t, up_size)
    return t


# ============================ parameter init ============================

class ParamGen:
    def __init__(self, key):
        self._key = key

    def _next(self):
        self._key, k = jax.random.split(self._key)
        return k

    def normal(self, shape, scale=0.05):
        return scale * jax.random.normal(self._next(), shape, jnp.float32)

    def conv(self, kh, kw, cin, cout):
        fan_in = kh * kw * cin
        return jax.random.normal(self._next(), (kh, kw, cin, cout),
                                 jnp.float32) / jnp.sqrt(float(fan_in))

    def linear(self, cin, cout):
        w = jax.random.normal(self._next(), (cin, cout), jnp.float32) / jnp.sqrt(float(cin))
        b = self.normal((cout,), 0.01)
        return w, b

    def bn(self, c):
        return dict(gamma=1.0 + self.normal((c,)),
                    beta=self.normal((c,)),
                    mean=self.normal((c,)),
                    var=1.0 + jnp.abs(self.normal((c,))))


def init_model(key):
    gen = ParamGen(key)
    P = {}
    bw = 1 if SMALL else 4

    P["conv_in"] = gen.conv(3 if SMALL else 7, 3 if SMALL else 7, 3, NUM_INIT)
    P["bn_in"] = gen.bn(NUM_INIT)

    def make_block(in_chs, c1a, c3b, c1c, inc, groups, dil, btype):
        p = {}
        if btype in ("proj", "down"):
            p["proj_bn"] = gen.bn(in_chs)
            p["proj_w"] = gen.conv(1, 1, in_chs, c1c + 2 * inc)
        p["bn1"] = gen.bn(in_chs)
        p["w1"] = gen.conv(1, 1, in_chs, c1a)
        p["bn2"] = gen.bn(c1a)
        p["w2"] = gen.conv(3, 3, c1a // groups, c3b)      # grouped 3x3
        # Fold the channel_shuffle (applied between conv "b" and bn3/conv "c")
        # into bn3 / w3's input-channel order at init: equivalent function,
        # zero runtime shuffle passes.
        inv = _shuffle_inverse_perm(c3b, groups)
        bn3 = gen.bn(c3b)
        p["bn3"] = {k: v[inv] for k, v in bn3.items()}
        w3 = gen.conv(1, 1, c3b, c1c + inc)
        p["w3"] = w3[:, :, inv, :]
        return dict(params=p, c1c=c1c, inc=inc, groups=groups, dil=dil, type=btype)

    # ---- stage 1 ----
    c1c = 64 * bw; inc = INC_SEC[0]; c1a = K_R * c1c // (64 * bw); c3b = c1a
    stg1 = [make_block(NUM_INIT, c1a, c3b, c1c, inc, GROUPS, DIL_SEC[0], "proj")]
    in_chs = c1c + 3 * inc
    for _ in range(2, K_SEC[0] + 1):
        stg1.append(make_block(in_chs, c1a, c3b, c1c, inc, GROUPS, DIL_SEC[0], "normal"))
        in_chs += inc
    P["stg1"] = stg1
    stg1_ch = in_chs
    # ---- stage 2 ----
    c1c = 128 * bw; inc = INC_SEC[1]; c1a = K_R * c1c // (64 * bw); c3b = c1a
    stg2 = [make_block(in_chs, c1a, c3b, c1c, inc, GROUPS, DIL_SEC[1], "down")]
    in_chs = c1c + 3 * inc
    for _ in range(2, K_SEC[1] + 1):
        stg2.append(make_block(in_chs, c1a, c3b, c1c, inc, GROUPS, DIL_SEC[1], "normal"))
        in_chs += inc
    P["stg2"] = stg2
    stg2_ch = in_chs
    # ---- stage 3 ----
    c1c = 256 * bw; inc = INC_SEC[2]; c1a = K_R * c1c // (64 * bw); c3b = c1a
    stg3 = [make_block(in_chs, c1a, c3b, c1c, inc, GROUPS, DIL_SEC[2], "down")]
    in_chs = c1c + 3 * inc
    for _ in range(2, K_SEC[2] // 2 + 1):
        stg3.append(make_block(in_chs, c1a, c3b, c1c, inc, GROUPS, DIL_SEC[2], "normal"))
        in_chs += inc
    for _ in range(K_SEC[2] // 2 + 1, K_SEC[2] + 1):
        stg3.append(make_block(in_chs, c1a, c3b, c1c, inc, GROUPS, DIL_SEC[3], "normal"))
        in_chs += inc
    P["stg3"] = stg3
    # ---- stage 4 ----
    c1c = 512 * bw; inc = INC_SEC[3]; c1a = K_R * c1c // (64 * bw); c3b = c1a
    stg4 = [make_block(in_chs, c1a, c3b, c1c, inc, GROUPS, DIL_SEC[4], "proj")]
    in_chs = c1c + 3 * inc
    for _ in range(2, K_SEC[3] + 1):
        stg4.append(make_block(in_chs, c1a, c3b, c1c, inc, GROUPS, DIL_SEC[4], "normal"))
        in_chs += inc
    P["stg4"] = stg4
    P["stg4_bn"] = gen.bn(in_chs)             # conv5_bn_ac (CatInPlaceABN)
    stg4_ch = in_chs

    def make_aspp(in_c, out_c):
        return dict(w_gap=gen.conv(1, 1, in_c, out_c),
                    w0=gen.conv(1, 1, in_c, out_c),
                    w1=gen.conv(3, 3, in_c, out_c),
                    w2=gen.conv(3, 3, in_c, out_c),
                    w3=gen.conv(3, 3, in_c, out_c),
                    bn=gen.bn(5 * out_c),
                    w_down=gen.conv(1, 1, 5 * out_c, out_c))

    P["aspp1"] = make_aspp(stg4_ch, OUT_SEC[0])
    # NOTE: the PyTorch module hard-codes 704 / 336 (stage-2 / stage-1 widths of the
    # default config); here the computed widths of the reduced config are used.
    P["aspp2_in_bn"] = gen.bn(stg2_ch)
    P["aspp2"] = make_aspp(OUT_SEC[0] + stg2_ch, OUT_SEC[1])
    P["aspp3_in_bn"] = gen.bn(stg1_ch)
    P["aspp3"] = make_aspp(OUT_SEC[1] + stg1_ch, OUT_SEC[2])

    def make_se(c, r):
        h = max(c // r, 1)
        w1, b1 = gen.linear(c, h)
        w2, b2 = gen.linear(h, c)
        return dict(w1=w1, b1=b1, w2=w2, b2=b2)

    def make_score(cin):
        w = gen.conv(1, 1, cin, CLASSES)
        b = gen.normal((CLASSES,), 0.05)
        return dict(w=w, b=b, se=make_se(CLASSES, 4))

    P["score1"] = make_score(OUT_SEC[0])
    P["score2"] = make_score(OUT_SEC[1])
    P["score3"] = make_score(OUT_SEC[2])
    P["score4_bn"] = gen.bn(CLASSES)
    P["score4"] = make_score(CLASSES)
    return P


# ============================ full forward ============================

def forward(x_nchw, P):
    x = jnp.transpose(x_nchw, (0, 2, 3, 1)).astype(jnp.float32)   # NCHW -> NHWC
    # encode_in: conv (stride 2) with fused bn_in + LeakyReLU epilogue -> maxpool 3x3/2
    t = conv2d(x, P["conv_in"], stride=2, padding=1 if SMALL else 3,
               out_bn=P["bn_in"], post_act=True)
    h = max_pool_3x3_s2_p1(t)

    for blk in P["stg1"]:
        h = dpn_block(h, blk)
    en_stg1 = h
    for blk in P["stg2"]:
        h = dpn_block(h, blk)
    en_stg2 = h
    for blk in P["stg3"]:
        h = dpn_block(h, blk)
    for blk in P["stg4"]:
        h = dpn_block(h, blk)
    en_stg4 = cat_abn(h, P["stg4_bn"])

    feat16 = (IN_SIZE[0] // 16, IN_SIZE[1] // 16)
    feat8 = (IN_SIZE[0] // 8, IN_SIZE[1] // 8)
    feat4 = (IN_SIZE[0] // 4, IN_SIZE[1] // 4)

    out_stg1, de_stg1 = aspp_block(en_stg4, P["aspp1"], OUT_SEC[0], feat16, 2, ASPP_SEC)
    a2 = cat_abn(en_stg2, P["aspp2_in_bn"])
    x2 = channel_shuffle(jnp.concatenate([de_stg1, a2], axis=-1), 2)
    out_stg2, de_stg2 = aspp_block(x2, P["aspp2"], OUT_SEC[1], feat8, 2,
                                   tuple(2 * a for a in ASPP_SEC))
    a3 = cat_abn(en_stg1, P["aspp3_in_bn"])
    x3 = channel_shuffle(jnp.concatenate([de_stg2, a3], axis=-1), 2)
    de_stg3 = aspp_block(x3, P["aspp3"], OUT_SEC[2], feat4, 4,
                         tuple(4 * a for a in ASPP_SEC))[1]

    out1 = score_head(out_stg1, P["score1"], up_size=IN_SIZE)
    out2 = score_head(out_stg2, P["score2"], up_size=IN_SIZE)
    out3 = score_head(de_stg3, P["score3"], up_size=None)

    fused = fused_max3(out1, out2, out3)
    # score4: ABN prologue + 1x1 conv + bias fused into a single Pallas matmul.
    t = conv2d(fused, P["score4"]["w"], bias=P["score4"]["b"],
               in_bn=P["score4_bn"], pre_act=True)
    out4 = se_block(t, P["score4"]["se"])

    to_nchw = lambda a: jnp.transpose(a, (0, 3, 1, 2)).astype(jnp.float32)
    return tuple(to_nchw(o) for o in (out1, out2, out3, out4))


# ============================ main ============================

if __name__ == "__main__":
    key = jax.random.PRNGKey(0)
    pkey, xkey = jax.random.split(key)
    params = init_model(pkey)
    x = jax.random.normal(xkey, (2, 3, IN_SIZE[0], IN_SIZE[1]), jnp.float32)

    outs = forward(x, params)
    outs = jax.block_until_ready(outs)

    expected = (2, CLASSES, IN_SIZE[0], IN_SIZE[1])
    assert all(o.shape == expected for o in outs), [o.shape for o in outs]
    assert all(bool(jnp.all(jnp.isfinite(o))) for o in outs)
    print("KERNEL_OK")
</pallas_src>

<mosaic_0001>
module attributes {stable_mosaic.version = 11 : i64} {
  func.func @kernel(%arg0: i32, %arg1: i32, %arg2: i32, %arg3: memref<256x27xbf16, #tpu.memory_space<vmem>>, %arg4: memref<27x128xbf16, #tpu.memory_space<vmem>>, %arg5: memref<1x128xf32, #tpu.memory_space<vmem>>, %arg6: memref<1x128xf32, #tpu.memory_space<vmem>>, %arg7: memref<256x128xbf16, #tpu.memory_space<vmem>>, %arg8: memref<256x128xf32, #tpu.memory_space<vmem>>) attributes {dimension_semantics = [#tpu.dimension_semantics<parallel>, #tpu.dimension_semantics<parallel>, #tpu.dimension_semantics<arbitrary>], iteration_bounds = array<i64: 2, 1, 1>, scalar_prefetch = 0 : i64, scratch_operands = 1 : i64, tpu.core_type = #tpu.core_type<tc>, window_params = [{transform_indices = @transform_0, window_bounds = array<i64: 256, 27>}, {transform_indices = @transform_1, window_bounds = array<i64: 27, 128>}, {transform_indices = @transform_2, window_bounds = array<i64: 1, 128>}, {transform_indices = @transform_3, window_bounds = array<i64: 1, 128>}, {transform_indices = @transform_4, window_bounds = array<i64: 256, 128>}]} {
    %c0_i32 = arith.constant 0 : i32
    %0 = arith.cmpi eq, %arg2, %c0_i32 : i32
    %1 = arith.extui %0 : i1 to i32
    %c0_i32_0 = arith.constant 0 : i32
    %2 = arith.cmpi ne, %1, %c0_i32_0 : i32
    scf.if %2 {
      %cst_10 = arith.constant 0.000000e+00 : f32
      %12 = vector.broadcast %cst_10 : f32 to vector<256x128xf32>
      %c0_11 = arith.constant 0 : index
      %c0_12 = arith.constant 0 : index
      %13 = vector.load %arg8[%c0_11, %c0_12] : memref<256x128xf32, #tpu.memory_space<vmem>>, vector<256x128xf32>
      tpu.vector_store %arg8[%c0_11, %c0_12], %12 {strides = array<i32>} : memref<256x128xf32, #tpu.memory_space<vmem>>, vector<256x128xf32>,
    } else {
    }
    %c0 = arith.constant 0 : index
    %c0_1 = arith.constant 0 : index
    %3 = vector.load %arg3[%c0, %c0_1] : memref<256x27xbf16, #tpu.memory_space<vmem>>, vector<256x27xbf16>
    %c0_2 = arith.constant 0 : index
    %c0_3 = arith.constant 0 : index
    %4 = vector.load %arg8[%c0_2, %c0_3] : memref<256x128xf32, #tpu.memory_space<vmem>>, vector<256x128xf32>
    %c0_4 = arith.constant 0 : index
    %c0_5 = arith.constant 0 : index
    %5 = vector.load %arg4[%c0_4, %c0_5] : memref<27x128xbf16, #tpu.memory_space<vmem>>, vector<27x128xbf16>
    %cst = arith.constant dense<0.000000e+00> : vector<256x128xf32>
    %6 = tpu.matmul %3, %5, %cst {dimension_numbers = #tpu.dot_dimension_numbers<[1], [0], [0], [1], [0, 0, 1, 1], [], []>} : vector<256x27xbf16>, vector<27x128xbf16>, vector<256x128xf32> -> vector<256x128xf32>
    %7 = arith.addf %4, %6 : vector<256x128xf32>
    %c0_6 = arith.constant 0 : index
    %c0_7 = arith.constant 0 : index
    %8 = vector.load %arg8[%c0_6, %c0_7] : memref<256x128xf32, #tpu.memory_space<vmem>>, vector<256x128xf32>
    tpu.vector_store %arg8[%c0_6, %c0_7], %7 {strides = array<i32>} : memref<256x128xf32, #tpu.memory_space<vmem>>, vector<256x128xf32>,
    %c0_i32_8 = arith.constant 0 : i32
    %9 = arith.cmpi eq, %arg2, %c0_i32_8 : i32
    %10 = arith.extui %9 : i1 to i32
    %c0_i32_9 = arith.constant 0 : i32
    %11 = arith.cmpi ne, %10, %c0_i32_9 : i32
    scf.if %11 {
      %c0_10 = arith.constant 0 : index
      %c0_11 = arith.constant 0 : index
      %12 = vector.load %arg8[%c0_10, %c0_11] : memref<256x128xf32, #tpu.memory_space<vmem>>, vector<256x128xf32>
      %c0_12 = arith.constant 0 : index
      %c0_13 = arith.constant 0 : index
      %13 = vector.load %arg5[%c0_12, %c0_13] : memref<1x128xf32, #tpu.memory_space<vmem>>, vector<1x128xf32>
      %14 = vector.broadcast %13 : vector<1x128xf32> to vector<256x128xf32>
      %15 = arith.mulf %12, %14 : vector<256x128xf32>
      %c0_14 = arith.constant 0 : index
      %c0_15 = arith.constant 0 : index
      %16 = vector.load %arg6[%c0_14, %c0_15] : memref<1x128xf32, #tpu.memory_space<vmem>>, vector<1x128xf32>
      %17 = vector.broadcast %16 : vector<1x128xf32> to vector<256x128xf32>
      %18 = arith.addf %15, %17 : vector<256x128xf32>
      %cst_16 = arith.constant 0.000000e+00 : f32
      %19 = vector.broadcast %cst_16 : f32 to vector<256x128xf32>
      %20 = arith.cmpf oge, %18, %19 : vector<256x128xf32>
      %cst_17 = arith.constant 0.00999999977 : f32
      %21 = vector.broadcast %cst_17 : f32 to vector<256x128xf32>
      %22 = arith.mulf %21, %18 : vector<256x128xf32>
      %23 = arith.select %20, %18, %22 : vector<256x128xi1>, vector<256x128xf32>
      %24 = arith.truncf %23 : vector<256x128xf32> to vector<256x128xbf16>
      %c0_18 = arith.constant 0 : index
      %c0_19 = arith.constant 0 : index
      %25 = vector.load %arg7[%c0_18, %c0_19] : memref<256x128xbf16, #tpu.memory_space<vmem>>, vector<256x128xbf16>
      tpu.vector_store %arg7[%c0_18, %c0_19], %24 {strides = array<i32>} : memref<256x128xbf16, #tpu.memory_space<vmem>>, vector<256x128xbf16>,
    } else {
    }
    return
  }
  func.func @transform_0(%arg0: i32, %arg1: i32, %arg2: i32) -> (i32, i32) {
    %c0_i32 = arith.constant 0 : i32
    return %arg0, %arg2 : i32, i32
  }
  func.func @transform_1(%arg0: i32, %arg1: i32, %arg2: i32) -> (i32, i32) {
    %c0_i32 = arith.constant 0 : i32
    return %arg2, %arg1 : i32, i32
  }
  func.func @transform_2(%arg0: i32, %arg1: i32, %arg2: i32) -> (i32, i32) {
    %c0_i32 = arith.constant 0 : i32
    %c0_i32_0 = arith.constant 0 : i32
    return %c0_i32, %arg1 : i32, i32
  }
  func.func @transform_3(%arg0: i32, %arg1: i32, %arg2: i32) -> (i32, i32) {
    %c0_i32 = arith.constant 0 : i32
    %c0_i32_0 = arith.constant 0 : i32
    return %c0_i32, %arg1 : i32, i32
  }
  func.func @transform_4(%arg0: i32, %arg1: i32, %arg2: i32) -> (i32, i32) {
    %c0_i32 = arith.constant 0 : i32
    return %arg0, %arg1 : i32, i32
  }
}

</mosaic_0001>

<llo_original>
// kernel: _fused_mm.1
$region0: #{_fused_mm.1}
  #allocation0 [shape = 'u32[]', space=smem, size = 0x4, offset = 0x4, fixed_abs, tag = 'smem constant byte address 0x4 - core index']
  #allocation1 [shape = 'u32[144,128]{1,0:T(1,128)}', space=vmem, size = 0x12000, scoped, tag = 'internal scratch']
  #allocation2 [shape = 'f32[256,128]{1,0:T(8,128)}', space=vmem, size = 0x20000, scoped, tag = 'scratch operand']
  %s0 = inlined_call_operand.hbm [shape: bf16[512,27], index: 0, kind: input, shape index: {}]
  %s1 = inlined_call_operand.hbm [shape: bf16[27,128], index: 1, kind: input, shape index: {}]
  %s2 = inlined_call_operand.hbm [shape: f32[1,128], index: 2, kind: input, shape index: {}]
  %s3 = inlined_call_operand.hbm [shape: f32[1,128], index: 3, kind: input, shape index: {}]
  %s4 = inlined_call_operand.hbm [shape: bf16[512,128], index: 4, kind: output, shape index: {}]
  %s5 = sld [smem:[#allocation0]]
  $region73: #{_fused_mm.1} parent=0
    _
  %s7 = ssub.s32 1, %s5
  %s8 = scalar_select 0, %s7, %s5
  $region1: #{_fused_mm.1} parent=0
    #allocation3 [shape = 'u8[131072]{0}', space=vmem, size = 0x20000, scoped, tag = 'input window, operand 0']
    #allocation4 [shape = 's32[2]{0}', space=sflag, size = 0x8, scoped, tag = 'scoped memory for _fused_mm.1']
    #allocation5 [shape = 's32[2]{0}', space=sflag, size = 0x8, scoped, tag = 'scoped memory for _fused_mm.1']
    #allocation6 [shape = 'u8[8192]{0}', space=vmem, size = 0x2000, scoped, tag = 'input window, operand 1, single buffered']
    #allocation7 [shape = 's32[1]{0}', space=sflag, size = 0x4, scoped, tag = 'scoped memory for _fused_mm.1']
    #allocation8 [shape = 'u8[512]{0}', space=vmem, size = 0x400, scoped, tag = 'input window, operand 2, single buffered']
    #allocation9 [shape = 'u8[512]{0}', space=vmem, size = 0x400, scoped, tag = 'input window, operand 3, single buffered']
    #allocation10 [shape = 's32[1]{0}', space=sflag, size = 0x4, scoped, tag = 'scoped memory for _fused_mm.1']
    #allocation11 [shape = 'u8[131072]{0}', space=vmem, size = 0x20000, scoped, tag = 'output window, operand 0']
    %9 = vsyncpa [#allocation4], 0
    %s10 = scalar_lea.sflag [#allocation4], 1
    %11 = vsyncpa %s10, 0
    %12 = vsyncpa [#allocation7], 0
    %13 = vsyncpa [#allocation10], 0
    %14 = vsyncpa [#allocation5], 0
    %s15 = scalar_lea.sflag [#allocation5], 1
    %16 = vsyncpa %s15, 0
    loop: start=0, step=1, limit=4
    $region2: #{_fused_mm.1} parent=1 // loop_pre_header
      _
    $region3: #{_fused_mm.1} parent=1 // loop_header
      %s18 = sphi 0, %s22
      %p19 = scmp.ge.s32.totalorder %s18, 4
      %s25 = sphi 0, %s44
      %s26 = sphi 0, %s40
      %s27 = sphi 0, %s36
      %s28 = sphi 0, %s25
      %s29 = sphi 0, %s26
      %s30 = sphi 0, %s27
      %s31 = sphi 0, %s28
      %s32 = sphi 0, %s29
      %s33 = sphi 0, %s30
      %s49 = sphi 0, %s51
      %s52 = sphi 0, %s49
      %s53 = sphi 0, %s52
      %s69 = sphi 0, %s53
      %s77 = sphi 0, %s79
      %s80 = sphi 0, %s77
      %s81 = sphi 0, %s80
      %s97 = sphi 0, %s81
      %s103 = sphi 0, %s105
      %s106 = sphi 0, %s103
      %s107 = sphi 0, %s106
      %s123 = sphi 0, %s107
      %s129 = sphi 0, %s131
      %s132 = sphi 0, %s129
      %s133 = sphi 0, %s132
      %s149 = sphi 0, %s133
      %s157 = sphi 0, %s159
      %s160 = sphi 0, %s157
      %s161 = sphi 0, %s160
      %s177 = sphi 0, %s161
    $region4: #{_fused_mm.1} parent=1 // loop_header_branch
      %21 = sbr.rel (%p19) target = $region8
    $region5: #{_fused_mm.1} parent=1 // loop_body
      %s23 = ssub.s32 %s18, 1
      %s24 = ssub.s32 %s18, 2
      %s34 = sadd.s32 1, %s27
      %p35 = scmp.ge.s32.totalorder %s34, 1
      %s36 = scalar_select %p35, 0, %s34
      %s37 = sadd.s32 1, %s26
      %s38 = scalar_select %p35, %s37, %s26
      %p39 = scmp.ge.s32.totalorder %s38, 1
      %s40 = scalar_select %p39, 0, %s38
      %s41 = sadd.s32 1, %s25
      %s42 = scalar_select %p39, %s41, %s25
      %p43 = scmp.ge.s32.totalorder %s42, 2
      %s44 = scalar_select %p43, 0, %s42
      %s45 = ssub.s32 %s25, %s44
      %s46 = ssub.s32 %s27, %s36
      %s47 = sor.u32 %s45, %s46
      %p48 = scmp.eq.s32.totalorder %s47, 0
      %s50 = sadd.s32 %s49, 1
      %s51 = scalar_select %p48, %s49, %s50
      %p54 = pneg %p48
      %p55 = scmp.eq.s32.totalorder %s18, 1
      %p56 = por %p54, %p55
      %p57 = scmp.ne.s32.totalorder %s49, %s52
      %p58 = scmp.eq.s32.totalorder %s18, 0
      %p59 = por %p57, %p58
      %p60 = scmp.ne.s32.totalorder %s49, %s52
      %p61 = scmp.eq.s32.totalorder %s23, 1
      %p62 = por %p60, %p61
      %p63 = scmp.ne.s32.totalorder %s52, %s53
      %p64 = scmp.eq.s32.totalorder %s23, 0
      %p65 = por %p63, %p64
      %p66 = scmp.ne.s32.totalorder %s52, %s53
      %p67 = scmp.eq.s32.totalorder %s24, 1
      %p68 = por %p66, %p67
      %p70 = scmp.ne.s32.totalorder %s53, %s69
      %p71 = scmp.eq.s32.totalorder %s24, 0
      %p72 = por %p70, %p71
      %s73 = ssub.s32 %s27, %s36
      %s74 = ssub.s32 %s26, %s40
      %s75 = sor.u32 %s73, %s74
      %p76 = scmp.eq.s32.totalorder %s75, 0
      %s78 = sadd.s32 %s77, 1
      %s79 = scalar_select %p76, %s77, %s78
      %p82 = pneg %p76
      %p83 = scmp.eq.s32.totalorder %s18, 1
      %p84 = por %p82, %p83
      %p85 = scmp.ne.s32.totalorder %s77, %s80
      %p86 = scmp.eq.s32.totalorder %s18, 0
      %p87 = por %p85, %p86
      %p88 = scmp.ne.s32.totalorder %s77, %s80
      %p89 = scmp.eq.s32.totalorder %s23, 1
      %p90 = por %p88, %p89
      %p91 = scmp.ne.s32.totalorder %s80, %s81
      %p92 = scmp.eq.s32.totalorder %s23, 0
      %p93 = por %p91, %p92
      %p94 = scmp.ne.s32.totalorder %s80, %s81
      %p95 = scmp.eq.s32.totalorder %s24, 1
      %p96 = por %p94, %p95
      %p98 = scmp.ne.s32.totalorder %s81, %s97
      %p99 = scmp.eq.s32.totalorder %s24, 0
      %p100 = por %p98, %p99
      %s101 = ssub.s32 %s26, %s40
      %p102 = scmp.eq.s32.totalorder %s101, 0
      %s104 = sadd.s32 %s103, 1
      %s105 = scalar_select %p102, %s103, %s104
      %p108 = pneg %p102
      %p109 = scmp.eq.s32.totalorder %s18, 1
      %p110 = por %p108, %p109
      %p111 = scmp.ne.s32.totalorder %s103, %s106
      %p112 = scmp.eq.s32.totalorder %s18, 0
      %p113 = por %p111, %p112
      %p114 = scmp.ne.s32.totalorder %s103, %s106
      %p115 = scmp.eq.s32.totalorder %s23, 1
      %p116 = por %p114, %p115
      %p117 = scmp.ne.s32.totalorder %s106, %s107
      %p118 = scmp.eq.s32.totalorder %s23, 0
      %p119 = por %p117, %p118
      %p120 = scmp.ne.s32.totalorder %s106, %s107
      %p121 = scmp.eq.s32.totalorder %s24, 1
      %p122 = por %p120, %p121
      %p124 = scmp.ne.s32.totalorder %s107, %s123
      %p125 = scmp.eq.s32.totalorder %s24, 0
      %p126 = por %p124, %p125
      %s127 = ssub.s32 %s26, %s40
      %p128 = scmp.eq.s32.totalorder %s127, 0
      %s130 = sadd.s32 %s129, 1
      %s131 = scalar_select %p128, %s129, %s130
      %p134 = pneg %p128
      %p135 = scmp.eq.s32.totalorder %s18, 1
      %p136 = por %p134, %p135
      %p137 = scmp.ne.s32.totalorder %s129, %s132
      %p138 = scmp.eq.s32.totalorder %s18, 0
      %p139 = por %p137, %p138
      %p140 = scmp.ne.s32.totalorder %s129, %s132
      %p141 = scmp.eq.s32.totalorder %s23, 1
      %p142 = por %p140, %p141
      %p143 = scmp.ne.s32.totalorder %s132, %s133
      %p144 = scmp.eq.s32.totalorder %s23, 0
      %p145 = por %p143, %p144
      %p146 = scmp.ne.s32.totalorder %s132, %s133
      %p147 = scmp.eq.s32.totalorder %s24, 1
      %p148 = por %p146, %p147
      %p150 = scmp.ne.s32.totalorder %s133, %s149
      %p151 = scmp.eq.s32.totalorder %s24, 0
      %p152 = por %p150, %p151
      %s153 = ssub.s32 %s25, %s44
      %s154 = ssub.s32 %s26, %s40
      %s155 = sor.u32 %s153, %s154
      %p156 = scmp.eq.s32.totalorder %s155, 0
      %s158 = sadd.s32 %s157, 1
      %s159 = scalar_select %p156, %s157, %s158
      %p162 = pneg %p156
      %p163 = scmp.eq.s32.totalorder %s18, 1
      %p164 = por %p162, %p163
      %p165 = scmp.ne.s32.totalorder %s157, %s160
      %p166 = scmp.eq.s32.totalorder %s18, 0
      %p167 = por %p165, %p166
      %p168 = scmp.ne.s32.totalorder %s157, %s160
      %p169 = scmp.eq.s32.totalorder %s23, 1
      %p170 = por %p168, %p169
      %p171 = scmp.ne.s32.totalorder %s160, %s161
      %p172 = scmp.eq.s32.totalorder %s23, 0
      %p173 = por %p171, %p172
      %p174 = scmp.ne.s32.totalorder %s160, %s161
      %p175 = scmp.eq.s32.totalorder %s24, 1
      %p176 = por %p174, %p175
      %p178 = scmp.ne.s32.totalorder %s161, %s177
      %p179 = scmp.eq.s32.totalorder %s24, 0
      %p180 = por %p178, %p179
      %p181 = scmp.le.s32.totalorder 1, %s18
      %p182 = scmp.lt.s32.totalorder %s18, 3
      %p183 = pnand %p181, %p182
      %p184 = pneg %p183
      // Predicated region
      $region9: #{_fused_mm.1} parent=5 // pred_check
        _
      $region10: #{_fused_mm.1} parent=5 // pred_check_branch
        %186 = sbr.rel (%p183) target = $region12
      $region11: #{_fused_mm.1} parent=5 // pred_region
        %s187 = ssub.s32 %s18, 1
        // Predicated region
        $region13: #{_fused_mm.1} parent=11 // pred_check
          %p188 = pneg %p93
        $region14: #{_fused_mm.1} parent=11 // pred_check_branch
          %190 = sbr.rel (%p188) target = $region16
        $region15: #{_fused_mm.1} parent=11 // pred_region
          %s191 = smul.u32 4, %s30
          %s193 = ssub.s32 256, 256
          %194 = vsyncadd [#allocation7], %s193
          %s195 = sadd.s32 %s29, %s191
          %s196 = smul.addr %s195, 64
          %s197 = scalar_lea.hbm %s1, %s196
          %s198 = sshll.u32 [#allocation6], 4
          %s199 = int_to_ptr.vmem [resolvable:$true] %s198
          %204 = dma.hbm_to_vmem [thread:$0]  %s197, 256, %s199, [#allocation7], 64, 64, 4
        $region16: #{_fused_mm.1} parent=11 // pred_fallthru
          _
        // Predicated region
        $region17: #{_fused_mm.1} parent=11 // pred_check
          %p205 = pneg %p119
        $region18: #{_fused_mm.1} parent=11 // pred_check_branch
          %207 = sbr.rel (%p205) target = $region20
        $region19: #{_fused_mm.1} parent=11 // pred_region
          %s209 = ssub.s32 16, 16
          %210 = vsyncadd [#allocation7], %s209
          %s211 = smul.addr %s29, 16
          %s212 = scalar_lea.hbm %s2, %s211
          %s214 = sshll.u32 [#allocation8], 4
          %s215 = int_to_ptr.vmem [resolvable:$true] %s214
          %217 = dma.hbm_to_vmem [thread:$0]  %s212, 16, %s215, [#allocation7]
        $region20: #{_fused_mm.1} parent=11 // pred_fallthru
          _
        // Predicated region
        $region21: #{_fused_mm.1} parent=11 // pred_check
          %p218 = pneg %p145
        $region22: #{_fused_mm.1} parent=11 // pred_check_branch
          %220 = sbr.rel (%p218) target = $region24
        $region23: #{_fused_mm.1} parent=11 // pred_region
          %s222 = ssub.s32 16, 16
          %223 = vsyncadd [#allocation10], %s222
          %s224 = smul.addr %s29, 16
          %s225 = scalar_lea.hbm %s3, %s224
          %s227 = sshll.u32 [#allocation9], 4
          %s228 = int_to_ptr.vmem [resolvable:$true] %s227
          %230 = dma.hbm_to_vmem [thread:$0]  %s225, 16, %s228, [#allocation10]
        $region24: #{_fused_mm.1} parent=11 // pred_fallthru
          _
      $region12: #{_fused_mm.1} parent=5 // pred_fallthru
        _
      %p231 = scmp.lt.s32.totalorder %s18, 2
      // Predicated region
      $region25: #{_fused_mm.1} parent=5 // pred_check
        %p232 = pneg %p231
      $region26: #{_fused_mm.1} parent=5 // pred_check_branch
        %234 = sbr.rel (%p232) target = $region28
      $region27: #{_fused_mm.1} parent=5 // pred_region
        // Predicated region
        $region29: #{_fused_mm.1} parent=27 // pred_check
          %p235 = pneg %p59
        $region30: #{_fused_mm.1} parent=27 // pred_check_branch
          %237 = sbr.rel (%p235) target = $region32
        $region31: #{_fused_mm.1} parent=27 // pred_region
          %s238 = sand.u32 %s49, 1
          %s239 = scalar_lea.sflag [#allocation4], %s238
          %s240 = sand.u32 %s49, 1
          %s241 = smul.addr %s240, 128
          %s242 = scalar_lea.vmem [#allocation3], %s241
          %s243 = smul.u32 32, %s25
          %s245 = ssub.s32 2048, 2048
          %246 = vsyncadd %s239, %s245
          %s247 = sadd.s32 %s27, %s243
          %s248 = smul.addr %s247, 64
          %s249 = scalar_lea.hbm %s0, %s248
          %s250 = sshll.u32 %s242, 4
          %s251 = int_to_ptr.vmem [resolvable:$true] %s250
          %256 = dma.hbm_to_vmem [thread:$0]  %s249, 2048, %s251, %s239, 64, 64, 4
        $region32: #{_fused_mm.1} parent=27 // pred_fallthru
          _
      $region28: #{_fused_mm.1} parent=5 // pred_fallthru
        _
      %p257 = scmp.le.s32.totalorder 1, %s18
      %p258 = scmp.lt.s32.totalorder %s18, 3
      %p259 = pnand %p257, %p258
      %p260 = pneg %p259
      // Predicated region
      $region33: #{_fused_mm.1} parent=5 // pred_check
        _
      $region34: #{_fused_mm.1} parent=5 // pred_check_branch
        %262 = sbr.rel (%p259) target = $region36
      $region35: #{_fused_mm.1} parent=5 // pred_region
        %s263 = ssub.s32 %s18, 1
        %s264 = sand.u32 %s52, 1
        %s265 = scalar_lea.sflag [#allocation4], %s264
        %s266 = sand.u32 %s52, 1
        %s267 = smul.addr %s266, 128
        %s268 = scalar_lea.vmem [#allocation3], %s267
        // Predicated region
        $region37: #{_fused_mm.1} parent=35 // pred_check
          %p269 = pneg %p65
        $region38: #{_fused_mm.1} parent=35 // pred_check_branch
          %271 = sbr.rel (%p269) target = $region40
        $region39: #{_fused_mm.1} parent=35 // pred_region
          %272 = dma.done %s265, 2048
        $region40: #{_fused_mm.1} parent=35 // pred_fallthru
          _
        // Predicated region
        $region41: #{_fused_mm.1} parent=35 // pred_check
          %p273 = pneg %p93
        $region42: #{_fused_mm.1} parent=35 // pred_check_branch
          %275 = sbr.rel (%p273) target = $region44
        $region43: #{_fused_mm.1} parent=35 // pred_region
          %276 = dma.done [#allocation7], 256
        $region44: #{_fused_mm.1} parent=35 // pred_fallthru
          _
        // Predicated region
        $region45: #{_fused_mm.1} parent=35 // pred_check
          %p277 = pneg %p119
        $region46: #{_fused_mm.1} parent=35 // pred_check_branch
          %279 = sbr.rel (%p277) target = $region48
        $region47: #{_fused_mm.1} parent=35 // pred_region
          %280 = dma.done [#allocation7], 16
        $region48: #{_fused_mm.1} parent=35 // pred_fallthru
          _
        // Predicated region
        $region49: #{_fused_mm.1} parent=35 // pred_check
          %p281 = pneg %p145
        $region50: #{_fused_mm.1} parent=35 // pred_check_branch
          %283 = sbr.rel (%p281) target = $region52
        $region51: #{_fused_mm.1} parent=35 // pred_region
          %284 = dma.done [#allocation10], 16
        $region52: #{_fused_mm.1} parent=35 // pred_fallthru
          _
        %s285 = sand.u32 %s52, 1
        %s286 = scalar_lea.sflag [#allocation4], %s285
        %s287 = sand.u32 %s52, 1
        %s288 = smul.addr %s287, 128
        %s289 = scalar_lea.vmem [#allocation3], %s288
        %p290 = pneg %p65
        %p291 = pneg %p62
        %p292 = pneg %p93
        %p293 = pneg %p90
        %p294 = pneg %p119
        %p295 = pneg %p116
        %p296 = pneg %p145
        %p297 = pneg %p142
        %p298 = pneg %p173
        %p299 = pneg %p170
        %s300 = sand.u32 %s160, 1
        %s301 = scalar_lea.sflag [#allocation5], %s300
        %s302 = sand.u32 %s160, 1
        %s303 = smul.addr %s302, 128
        %s304 = scalar_lea.vmem [#allocation11], %s303
        %s305 = smul.u32 32, %s28
        %s306 = smul.u32 4, %s30
        %s307 = smul.u32 32, %s28
        %p309 = scmp.eq.s32.totalorder %s30, 0
        // Predicated region
        $region53: #{_fused_mm.1} parent=35 // pred_check
          %p310 = pneg %p309
        $region54: #{_fused_mm.1} parent=35 // pred_check_branch
          %312 = sbr.rel (%p310) target = $region56
        $region55: #{_fused_mm.1} parent=35 // pred_region
          %313 = vst [vmem:[#allocation2] sm:$0xff] 0.0
          %314 = vst [vmem:[#allocation2 + $0x8] sm:$0xff] 0.0
          %315 = vst [vmem:[#allocation2 + $0x10] sm:$0xff] 0.0
          %316 = vst [vmem:[#allocation2 + $0x18] sm:$0xff] 0.0
          %317 = vst [vmem:[#allocation2 + $0x20] sm:$0xff] 0.0
          %318 = vst [vmem:[#allocation2 + $0x28] sm:$0xff] 0.0
          %319 = vst [vmem:[#allocation2 + $0x30] sm:$0xff] 0.0
          %320 = vst [vmem:[#allocation2 + $0x38] sm:$0xff] 0.0
          %321 = vst [vmem:[#allocation2 + $0x40] sm:$0xff] 0.0
          %322 = vst [vmem:[#allocation2 + $0x48] sm:$0xff] 0.0
          %323 = vst [vmem:[#allocation2 + $0x50] sm:$0xff] 0.0
          %324 = vst [vmem:[#allocation2 + $0x58] sm:$0xff] 0.0
          %325 = vst [vmem:[#allocation2 + $0x60] sm:$0xff] 0.0
          %326 = vst [vmem:[#allocation2 + $0x68] sm:$0xff] 0.0
          %327 = vst [vmem:[#allocation2 + $0x70] sm:$0xff] 0.0
          %328 = vst [vmem:[#allocation2 + $0x78] sm:$0xff] 0.0
          %329 = vst [vmem:[#allocation2 + $0x80] sm:$0xff] 0.0
          %330 = vst [vmem:[#allocation2 + $0x88] sm:$0xff] 0.0
          %331 = vst [vmem:[#allocation2 + $0x90] sm:$0xff] 0.0
          %332 = vst [vmem:[#allocation2 + $0x98] sm:$0xff] 0.0
          %333 = vst [vmem:[#allocation2 + $0xa0] sm:$0xff] 0.0
          %334 = vst [vmem:[#allocation2 + $0xa8] sm:$0xff] 0.0
          %335 = vst [vmem:[#allocation2 + $0xb0] sm:$0xff] 0.0
          %336 = vst [vmem:[#allocation2 + $0xb8] sm:$0xff] 0.0
          %337 = vst [vmem:[#allocation2 + $0xc0] sm:$0xff] 0.0
          %338 = vst [vmem:[#allocation2 + $0xc8] sm:$0xff] 0.0
          %339 = vst [vmem:[#allocation2 + $0xd0] sm:$0xff] 0.0
          %340 = vst [vmem:[#allocation2 + $0xd8] sm:$0xff] 0.0
          %341 = vst [vmem:[#allocation2 + $0xe0] sm:$0xff] 0.0
          %342 = vst [vmem:[#allocation2 + $0xe8] sm:$0xff] 0.0
          %343 = vst [vmem:[#allocation2 + $0xf0] sm:$0xff] 0.0
          %344 = vst [vmem:[#allocation2 + $0xf8] sm:$0xff] 0.0
        $region56: #{_fused_mm.1} parent=35 // pred_fallthru
          _
        %v345 = vld [vmem:[%s268] sm:$0xf]
        %v346 = vld [vmem:[%s268 + $0x4] sm:$0xf]
        %v347 = vld [vmem:[%s268 + $0x8] sm:$0xf]
        %v348 = vld [vmem:[%s268 + $0xc] sm:$0xf]
        %v349 = vld [vmem:[%s268 + $0x10] sm:$0xf]
        %v350 = vld [vmem:[%s268 + $0x14] sm:$0xf]
        %v351 = vld [vmem:[%s268 + $0x18] sm:$0xf]
        %v352 = vld [vmem:[%s268 + $0x1c] sm:$0xf]
        %v353 = vld [vmem:[%s268 + $0x20] sm:$0xf]
        %v354 = vld [vmem:[%s268 + $0x24] sm:$0xf]
        %v355 = vld [vmem:[%s268 + $0x28] sm:$0xf]
        %v356 = vld [vmem:[%s268 + $0x2c] sm:$0xf]
        %v357 = vld [vmem:[%s268 + $0x30] sm:$0xf]
        %v358 = vld [vmem:[%s268 + $0x34] sm:$0xf]
        %v359 = vld [vmem:[%s268 + $0x38] sm:$0xf]
        %v360 = vld [vmem:[%s268 + $0x3c] sm:$0xf]
        %v361 = vld [vmem:[%s268 + $0x40] sm:$0xf]
        %v362 = vld [vmem:[%s268 + $0x44] sm:$0xf]
        %v363 = vld [vmem:[%s268 + $0x48] sm:$0xf]
        %v364 = vld [vmem:[%s268 + $0x4c] sm:$0xf]
        %v365 = vld [vmem:[%s268 + $0x50] sm:$0xf]
        %v366 = vld [vmem:[%s268 + $0x54] sm:$0xf]
        %v367 = vld [vmem:[%s268 + $0x58] sm:$0xf]
        %v368 = vld [vmem:[%s268 + $0x5c] sm:$0xf]
        %v369 = vld [vmem:[%s268 + $0x60] sm:$0xf]
        %v370 = vld [vmem:[%s268 + $0x64] sm:$0xf]
        %v371 = vld [vmem:[%s268 + $0x68] sm:$0xf]
        %v372 = vld [vmem:[%s268 + $0x6c] sm:$0xf]
        %v373 = vld [vmem:[%s268 + $0x70] sm:$0xf]
        %v374 = vld [vmem:[%s268 + $0x74] sm:$0xf]
        %v375 = vld [vmem:[%s268 + $0x78] sm:$0xf]
        %v376 = vld [vmem:[%s268 + $0x7c] sm:$0xf]
        %v377 = vld [vmem:[#allocation2] sm:$0xff]
        %v378 = vld [vmem:[#allocation2 + $0x8] sm:$0xff]
        %v379 = vld [vmem:[#allocation2 + $0x10] sm:$0xff]
        %v380 = vld [vmem:[#allocation2 + $0x18] sm:$0xff]
        %v381 = vld [vmem:[#allocation2 + $0x20] sm:$0xff]
        %v382 = vld [vmem:[#allocation2 + $0x28] sm:$0xff]
        %v383 = vld [vmem:[#allocation2 + $0x30] sm:$0xff]
        %v384 = vld [vmem:[#allocation2 + $0x38] sm:$0xff]
        %v385 = vld [vmem:[#allocation2 + $0x40] sm:$0xff]
        %v386 = vld [vmem:[#allocation2 + $0x48] sm:$0xff]
        %v387 = vld [vmem:[#allocation2 + $0x50] sm:$0xff]
        %v388 = vld [vmem:[#allocation2 + $0x58] sm:$0xff]
        %v389 = vld [vmem:[#allocation2 + $0x60] sm:$0xff]
        %v390 = vld [vmem:[#allocation2 + $0x68] sm:$0xff]
        %v391 = vld [vmem:[#allocation2 + $0x70] sm:$0xff]
        %v392 = vld [vmem:[#allocation2 + $0x78] sm:$0xff]
        %v393 = vld [vmem:[#allocation2 + $0x80] sm:$0xff]
        %v394 = vld [vmem:[#allocation2 + $0x88] sm:$0xff]
        %v395 = vld [vmem:[#allocation2 + $0x90] sm:$0xff]
        %v396 = vld [vmem:[#allocation2 + $0x98] sm:$0xff]
        %v397 = vld [vmem:[#allocation2 + $0xa0] sm:$0xff]
        %v398 = vld [vmem:[#allocation2 + $0xa8] sm:$0xff]
        %v399 = vld [vmem:[#allocation2 + $0xb0] sm:$0xff]
        %v400 = vld [vmem:[#allocation2 + $0xb8] sm:$0xff]
        %v401 = vld [vmem:[#allocation2 + $0xc0] sm:$0xff]
        %v402 = vld [vmem:[#allocation2 + $0xc8] sm:$0xff]
        %v403 = vld [vmem:[#allocation2 + $0xd0] sm:$0xff]
        %v404 = vld [vmem:[#allocation2 + $0xd8] sm:$0xff]
        %v405 = vld [vmem:[#allocation2 + $0xe0] sm:$0xff]
        %v406 = vld [vmem:[#allocation2 + $0xe8] sm:$0xff]
        %v407 = vld [vmem:[#allocation2 + $0xf0] sm:$0xff]
        %v408 = vld [vmem:[#allocation2 + $0xf8] sm:$0xff]
        %v409 = vld [vmem:[#allocation6] sm:$0xf]
        %v410 = vld [vmem:[#allocation6 + $0x4] sm:$0xf]
        %v411 = vld [vmem:[#allocation6 + $0x8] sm:$0xf]
        %v412 = vld [vmem:[#allocation6 + $0xc] sm:$0x3]
        %v445 = vunpack.c.l.b16 %v345
        %v446 = vunpack.c.l.b16 %v346
        %v447 = vunpack.c.l.b16 %v347
        %v448 = vunpack.c.l.b16 %v348
        %v449 = vunpack.c.l.b16 %v349
        %v450 = vunpack.c.l.b16 %v350
        %v451 = vunpack.c.l.b16 %v351
        %v452 = vunpack.c.l.b16 %v352
        %v453 = vunpack.c.l.b16 %v353
        %v454 = vunpack.c.l.b16 %v354
        %v455 = vunpack.c.l.b16 %v355
        %v456 = vunpack.c.l.b16 %v356
        %v457 = vunpack.c.l.b16 %v357
        %v458 = vunpack.c.l.b16 %v358
        %v459 = vunpack.c.l.b16 %v359
        %v460 = vunpack.c.l.b16 %v360
        %v461 = vunpack.c.l.b16 %v361
        %v462 = vunpack.c.l.b16 %v362
        %v463 = vunpack.c.l.b16 %v363
        %v464 = vunpack.c.l.b16 %v364
        %v465 = vunpack.c.l.b16 %v365
        %v466 = vunpack.c.l.b16 %v366
        %v467 = vunpack.c.l.b16 %v367
        %v468 = vunpack.c.l.b16 %v368
        %v469 = vunpack.c.l.b16 %v369
        %v470 = vunpack.c.l.b16 %v370
        %v471 = vunpack.c.l.b16 %v371
        %v472 = vunpack.c.l.b16 %v372
        %v473 = vunpack.c.l.b16 %v373
        %v474 = vunpack.c.l.b16 %v374
        %v475 = vunpack.c.l.b16 %v375
        %v476 = vunpack.c.l.b16 %v376
        %v477 = vpack.c.b16 %v446, %v445
        %v478 = vpack.c.b16 %v448, %v447
        %v479 = vpack.c.b16 %v450, %v449
        %v480 = vpack.c.b16 %v452, %v451
        %v481 = vpack.c.b16 %v454, %v453
        %v482 = vpack.c.b16 %v456, %v455
        %v483 = vpack.c.b16 %v458, %v457
        %v484 = vpack.c.b16 %v460, %v459
        %v485 = vpack.c.b16 %v462, %v461
        %v486 = vpack.c.b16 %v464, %v463
        %v487 = vpack.c.b16 %v466, %v465
        %v488 = vpack.c.b16 %v468, %v467
        %v489 = vpack.c.b16 %v470, %v469
        %v490 = vpack.c.b16 %v472, %v471
        %v491 = vpack.c.b16 %v474, %v473
        %v492 = vpack.c.b16 %v476, %v475
        %v497 = vunpack.c.l.b16 %v409
        %v498 = vunpack.c.l.b16 %v410
        %v499 = vunpack.c.l.b16 %v411
        %v500 = vunpack.c.l.b16 %v412
        %v501 = vpack.c.b16 %v498, %v497
        %v502 = vpack.c.b16 %v500, %v499
        %vm504 = vcmask 220160
        %v506 = vsel %vm504, %v477, 0
        %v509 = vsel %vm504, %v478, 0
        %v512 = vsel %vm504, %v479, 0
        %v515 = vsel %vm504, %v480, 0
        %v518 = vsel %vm504, %v481, 0
        %v521 = vsel %vm504, %v482, 0
        %v524 = vsel %vm504, %v483, 0
        %v527 = vsel %vm504, %v484, 0
        %v530 = vsel %vm504, %v485, 0
        %v533 = vsel %vm504, %v486, 0
        %v536 = vsel %vm504, %v487, 0
        %v539 = vsel %vm504, %v488, 0
        %v542 = vsel %vm504, %v489, 0
        %v545 = vsel %vm504, %v490, 0
        %v548 = vsel %vm504, %v491, 0
        %v551 = vsel %vm504, %v492, 0
        %vm553 = vcmask 1044480
        %vm554 = vcmask 1045504
        %v555 = vsel %vm553, 4294967295, 65535
        %v556 = vsel %vm554, %v555, 0
        %v558 = vand.u32 %v502, %v556
        %560 = vmatprep.subr.bf16.mxu0 0
        %561 = vmatpush1.bf16.msra.mxu0 %v501
        %562 = vmatprep.subr.bf16.mxu0 0
        %563 = vmatpush1.bf16.msra.mxu0 %v558
        %564 = vmatprep.subr.bf16.mxu0 0
        %565 = vmatpush1.bf16.msra.mxu0 0
        %566 = vmatprep.subr.bf16.mxu0 0
        %567 = vmatpush1.bf16.msra.mxu0 0
        %568 = vmatprep.subr.bf16.mxu0 0
        %569 = vmatpush1.bf16.msra.mxu0 0
        %570 = vmatprep.subr.bf16.mxu0 0
        %571 = vmatpush1.bf16.msra.mxu0 0
        %572 = vmatprep.subr.bf16.mxu0 0
        %573 = vmatpush1.bf16.msra.mxu0 0
        %574 = vmatprep.subr.bf16.mxu0 0
        %575 = vmatpush1.bf16.msra.mxu0 0
        %576 = vmatprep.subr.bf16.mxu0 0
        %577 = vmatpush1.bf16.msra.mxu0 0
        %578 = vmatprep.subr.bf16.mxu0 0
        %579 = vmatpush1.bf16.msra.mxu0 0
        %580 = vmatprep.subr.bf16.mxu0 0
        %581 = vmatpush1.bf16.msra.mxu0 0
        %582 = vmatprep.subr.bf16.mxu0 0
        %583 = vmatpush1.bf16.msra.mxu0 0
        %584 = vmatprep.subr.bf16.mxu0 0
        %585 = vmatpush1.bf16.msra.mxu0 0
        %586 = vmatprep.subr.bf16.mxu0 0
        %587 = vmatpush1.bf16.msra.mxu0 0
        %588 = vmatprep.subr.bf16.mxu0 0
        %589 = vmatpush1.bf16.msra.mxu0 0
        %590 = vmatprep.subr.bf16.mxu0 0
        %591 = vmatpush1.bf16.msra.mxu0 0
        %592 = vmatprep.mubr.bf16.mxu0 0
        %593 = vmatmul.mubr.bf16.gmra.mrb[0].mxu0 %v506
        %v594 = vpop.f32.mrb[0].mxu0
        %v595 = vadd.f32 0.0, %v594
        %v596 = vpop.f32.mrb[0].mxu0
        %v597 = vpop.f32.mrb[0].mxu0
        %v598 = vadd.f32 0.0, %v597
        %v599 = vpop.f32.mrb[0].mxu0
        %600 = vmatprep.mubr.bf16.mxu0 0
        %601 = vmatmul.mubr.bf16.gmra.mrb[0].mxu0 %v509
        %v602 = vpop.f32.mrb[0].mxu0
        %v603 = vadd.f32 0.0, %v602
        %v604 = vpop.f32.mrb[0].mxu0
        %v605 = vpop.f32.mrb[0].mxu0
        %v606 = vadd.f32 0.0, %v605
        %v607 = vpop.f32.mrb[0].mxu0
        %608 = vmatprep.mubr.bf16.mxu0 0
        %609 = vmatmul.mubr.bf16.gmra.mrb[0].mxu0 %v512
        %v610 = vpop.f32.mrb[0].mxu0
        %v611 = vadd.f32 0.0, %v610
        %v612 = vpop.f32.mrb[0].mxu0
        %v613 = vpop.f32.mrb[0].mxu0
        %v614 = vadd.f32 0.0, %v613
        %v615 = vpop.f32.mrb[0].mxu0
        %616 = vmatprep.mubr.bf16.mxu0 0
        %617 = vmatmul.mubr.bf16.gmra.mrb[0].mxu0 %v515
        %v618 = vpop.f32.mrb[0].mxu0
        %v619 = vadd.f32 0.0, %v618
        %v620 = vpop.f32.mrb[0].mxu0
        %v621 = vpop.f32.mrb[0].mxu0
        %v622 = vadd.f32 0.0, %v621
        %v623 = vpop.f32.mrb[0].mxu0
        %624 = vmatprep.mubr.bf16.mxu0 0
        %625 = vmatmul.mubr.bf16.gmra.mrb[0].mxu0 %v518
        %v626 = vpop.f32.mrb[0].mxu0
        %v627 = vadd.f32 0.0, %v626
        %v628 = vpop.f32.mrb[0].mxu0
        %v629 = vpop.f32.mrb[0].mxu0
        %v630 = vadd.f32 0.0, %v629
        %v631 = vpop.f32.mrb[0].mxu0
        %632 = vmatprep.mubr.bf16.mxu0 0
        %633 = vmatmul.mubr.bf16.gmra.mrb[0].mxu0 %v521
        %v634 = vpop.f32.mrb[0].mxu0
        %v635 = vadd.f32 0.0, %v634
        %v636 = vpop.f32.mrb[0].mxu0
        %v637 = vpop.f32.mrb[0].mxu0
        %v638 = vadd.f32 0.0, %v637
        %v639 = vpop.f32.mrb[0].mxu0
        %640 = vmatprep.mubr.bf16.mxu0 0
        %641 = vmatmul.mubr.bf16.gmra.mrb[0].mxu0 %v524
        %v642 = vpop.f32.mrb[0].mxu0
        %v643 = vadd.f32 0.0, %v642
        %v644 = vpop.f32.mrb[0].mxu0
        %v645 = vpop.f32.mrb[0].mxu0
        %v646 = vadd.f32 0.0, %v645
        %v647 = vpop.f32.mrb[0].mxu0
        %648 = vmatprep.mubr.bf16.mxu0 0
        %649 = vmatmul.mubr.bf16.gmra.mrb[0].mxu0 %v527
        %v650 = vpop.f32.mrb[0].mxu0
        %v651 = vadd.f32 0.0, %v650
        %v652 = vpop.f32.mrb[0].mxu0
        %v653 = vpop.f32.mrb[0].mxu0
        %v654 = vadd.f32 0.0, %v653
        %v655 = vpop.f32.mrb[0].mxu0
        %656 = vmatprep.mubr.bf16.mxu0 0
        %657 = vmatmul.mubr.bf16.gmra.mrb[0].mxu0 %v530
        %v658 = vpop.f32.mrb[0].mxu0
        %v659 = vadd.f32 0.0, %v658
        %v660 = vpop.f32.mrb[0].mxu0
        %v661 = vpop.f32.mrb[0].mxu0
        %v662 = vadd.f32 0.0, %v661
        %v663 = vpop.f32.mrb[0].mxu0
        %664 = vmatprep.mubr.bf16.mxu0 0
        %665 = vmatmul.mubr.bf16.gmra.mrb[0].mxu0 %v533
        %v666 = vpop.f32.mrb[0].mxu0
        %v667 = vadd.f32 0.0, %v666
        %v668 = vpop.f32.mrb[0].mxu0
        %v669 = vpop.f32.mrb[0].mxu0
        %v670 = vadd.f32 0.0, %v669
        %v671 = vpop.f32.mrb[0].mxu0
        %672 = vmatprep.mubr.bf16.mxu0 0
        %673 = vmatmul.mubr.bf16.gmra.mrb[0].mxu0 %v536
        %v674 = vpop.f32.mrb[0].mxu0
        %v675 = vadd.f32 0.0, %v674
        %v676 = vpop.f32.mrb[0].mxu0
        %v677 = vpop.f32.mrb[0].mxu0
        %v678 = vadd.f32 0.0, %v677
        %v679 = vpop.f32.mrb[0].mxu0
        %680 = vmatprep.mubr.bf16.mxu0 0
        %681 = vmatmul.mubr.bf16.gmra.mrb[0].mxu0 %v539
        %v682 = vpop.f32.mrb[0].mxu0
        %v683 = vadd.f32 0.0, %v682
        %v684 = vpop.f32.mrb[0].mxu0
        %v685 = vpop.f32.mrb[0].mxu0
        %v686 = vadd.f32 0.0, %v685
        %v687 = vpop.f32.mrb[0].mxu0
        %688 = vmatprep.mubr.bf16.mxu0 0
        %689 = vmatmul.mubr.bf16.gmra.mrb[0].mxu0 %v542
        %v690 = vpop.f32.mrb[0].mxu0
        %v691 = vadd.f32 0.0, %v690
        %v692 = vpop.f32.mrb[0].mxu0
        %v693 = vpop.f32.mrb[0].mxu0
        %v694 = vadd.f32 0.0, %v693
        %v695 = vpop.f32.mrb[0].mxu0
        %696 = vmatprep.mubr.bf16.mxu0 0
        %697 = vmatmul.mubr.bf16.gmra.mrb[0].mxu0 %v545
        %v698 = vpop.f32.mrb[0].mxu0
        %v699 = vadd.f32 0.0, %v698
        %v700 = vpop.f32.mrb[0].mxu0
        %v701 = vpop.f32.mrb[0].mxu0
        %v702 = vadd.f32 0.0, %v701
        %v703 = vpop.f32.mrb[0].mxu0
        %704 = vmatprep.mubr.bf16.mxu0 0
        %705 = vmatmul.mubr.bf16.gmra.mrb[0].mxu0 %v548
        %v706 = vpop.f32.mrb[0].mxu0
        %v707 = vadd.f32 0.0, %v706
        %v708 = vpop.f32.mrb[0].mxu0
        %v709 = vpop.f32.mrb[0].mxu0
        %v710 = vadd.f32 0.0, %v709
        %v711 = vpop.f32.mrb[0].mxu0
        %712 = vmatprep.mubr.bf16.mxu0 0
        %713 = vmatmul.mubr.bf16.gmra.mrb[0].mxu0 %v551
        %v714 = vpop.f32.mrb[0].mxu0
        %v715 = vadd.f32 0.0, %v714
        %v716 = vpop.f32.mrb[0].mxu0
        %v717 = vpop.f32.mrb[0].mxu0
        %v718 = vadd.f32 0.0, %v717
        %v719 = vpop.f32.mrb[0].mxu0
        %720 = vdwg.mxu0
        %v721 = vadd.f32 %v377, %v595
        %v722 = vadd.f32 %v378, %v598
        %v723 = vadd.f32 %v379, %v603
        %v724 = vadd.f32 %v380, %v606
        %v725 = vadd.f32 %v381, %v611
        %v726 = vadd.f32 %v382, %v614
        %v727 = vadd.f32 %v383, %v619
        %v728 = vadd.f32 %v384, %v622
        %v729 = vadd.f32 %v385, %v627
        %v730 = vadd.f32 %v386, %v630
        %v731 = vadd.f32 %v387, %v635
        %v732 = vadd.f32 %v388, %v638
        %v733 = vadd.f32 %v389, %v643
        %v734 = vadd.f32 %v390, %v646
        %v735 = vadd.f32 %v391, %v651
        %v736 = vadd.f32 %v392, %v654
        %v737 = vadd.f32 %v393, %v659
        %v738 = vadd.f32 %v394, %v662
        %v739 = vadd.f32 %v395, %v667
        %v740 = vadd.f32 %v396, %v670
        %v741 = vadd.f32 %v397, %v675
        %v742 = vadd.f32 %v398, %v678
        %v743 = vadd.f32 %v399, %v683
        %v744 = vadd.f32 %v400, %v686
        %v745 = vadd.f32 %v401, %v691
        %v746 = vadd.f32 %v402, %v694
        %v747 = vadd.f32 %v403, %v699
        %v748 = vadd.f32 %v404, %v702
        %v749 = vadd.f32 %v405, %v707
        %v750 = vadd.f32 %v406, %v710
        %v751 = vadd.f32 %v407, %v715
        %v752 = vadd.f32 %v408, %v718
        %753 = vst [vmem:[#allocation2] sm:$0xff] %v721
        %754 = vst [vmem:[#allocation2 + $0x8] sm:$0xff] %v722
        %755 = vst [vmem:[#allocation2 + $0x10] sm:$0xff] %v723
        %756 = vst [vmem:[#allocation2 + $0x18] sm:$0xff] %v724
        %757 = vst [vmem:[#allocation2 + $0x20] sm:$0xff] %v725
        %758 = vst [vmem:[#allocation2 + $0x28] sm:$0xff] %v726
        %759 = vst [vmem:[#allocation2 + $0x30] sm:$0xff] %v727
        %760 = vst [vmem:[#allocation2 + $0x38] sm:$0xff] %v728
        %761 = vst [vmem:[#allocation2 + $0x40] sm:$0xff] %v729
        %762 = vst [vmem:[#allocation2 + $0x48] sm:$0xff] %v730
        %763 = vst [vmem:[#allocation2 + $0x50] sm:$0xff] %v731
        %764 = vst [vmem:[#allocation2 + $0x58] sm:$0xff] %v732
        %765 = vst [vmem:[#allocation2 + $0x60] sm:$0xff] %v733
        %766 = vst [vmem:[#allocation2 + $0x68] sm:$0xff] %v734
        %767 = vst [vmem:[#allocation2 + $0x70] sm:$0xff] %v735
        %768 = vst [vmem:[#allocation2 + $0x78] sm:$0xff] %v736
        %769 = vst [vmem:[#allocation2 + $0x80] sm:$0xff] %v737
        %770 = vst [vmem:[#allocation2 + $0x88] sm:$0xff] %v738
        %771 = vst [vmem:[#allocation2 + $0x90] sm:$0xff] %v739
        %772 = vst [vmem:[#allocation2 + $0x98] sm:$0xff] %v740
        %773 = vst [vmem:[#allocation2 + $0xa0] sm:$0xff] %v741
        %774 = vst [vmem:[#allocation2 + $0xa8] sm:$0xff] %v742
        %775 = vst [vmem:[#allocation2 + $0xb0] sm:$0xff] %v743
        %776 = vst [vmem:[#allocation2 + $0xb8] sm:$0xff] %v744
        %777 = vst [vmem:[#allocation2 + $0xc0] sm:$0xff] %v745
        %778 = vst [vmem:[#allocation2 + $0xc8] sm:$0xff] %v746
        %779 = vst [vmem:[#allocation2 + $0xd0] sm:$0xff] %v747
        %780 = vst [vmem:[#allocation2 + $0xd8] sm:$0xff] %v748
        %781 = vst [vmem:[#allocation2 + $0xe0] sm:$0xff] %v749
        %782 = vst [vmem:[#allocation2 + $0xe8] sm:$0xff] %v750
        %783 = vst [vmem:[#allocation2 + $0xf0] sm:$0xff] %v751
        %784 = vst [vmem:[#allocation2 + $0xf8] sm:$0xff] %v752
        // Predicated region
        $region57: #{_fused_mm.1} parent=35 // pred_check
          %p785 = pneg %p309
        $region58: #{_fused_mm.1} parent=35 // pred_check_branch
          %787 = sbr.rel (%p785) target = $region60
        $region59: #{_fused_mm.1} parent=35 // pred_region
          %v788 = vld [vmem:[#allocation2] sm:$0xff]
          %v789 = vld [vmem:[#allocation2 + $0x8] sm:$0xff]
          %v790 = vld [vmem:[#allocation2 + $0x10] sm:$0xff]
          %v791 = vld [vmem:[#allocation2 + $0x18] sm:$0xff]
          %v792 = vld [vmem:[#allocation2 + $0x20] sm:$0xff]
          %v793 = vld [vmem:[#allocation2 + $0x28] sm:$0xff]
          %v794 = vld [vmem:[#allocation2 + $0x30] sm:$0xff]
          %v795 = vld [vmem:[#allocation2 + $0x38] sm:$0xff]
          %v796 = vld [vmem:[#allocation2 + $0x40] sm:$0xff]
          %v797 = vld [vmem:[#allocation2 + $0x48] sm:$0xff]
          %v798 = vld [vmem:[#allocation2 + $0x50] sm:$0xff]
          %v799 = vld [vmem:[#allocation2 + $0x58] sm:$0xff]
          %v800 = vld [vmem:[#allocation2 + $0x60] sm:$0xff]
          %v801 = vld [vmem:[#allocation2 + $0x68] sm:$0xff]
          %v802 = vld [vmem:[#allocation2 + $0x70] sm:$0xff]
          %v803 = vld [vmem:[#allocation2 + $0x78] sm:$0xff]
          %v804 = vld [vmem:[#allocation2 + $0x80] sm:$0xff]
          %v805 = vld [vmem:[#allocation2 + $0x88] sm:$0xff]
          %v806 = vld [vmem:[#allocation2 + $0x90] sm:$0xff]
          %v807 = vld [vmem:[#allocation2 + $0x98] sm:$0xff]
          %v808 = vld [vmem:[#allocation2 + $0xa0] sm:$0xff]
          %v809 = vld [vmem:[#allocation2 + $0xa8] sm:$0xff]
          %v810 = vld [vmem:[#allocation2 + $0xb0] sm:$0xff]
          %v811 = vld [vmem:[#allocation2 + $0xb8] sm:$0xff]
          %v812 = vld [vmem:[#allocation2 + $0xc0] sm:$0xff]
          %v813 = vld [vmem:[#allocation2 + $0xc8] sm:$0xff]
          %v814 = vld [vmem:[#allocation2 + $0xd0] sm:$0xff]
          %v815 = vld [vmem:[#allocation2 + $0xd8] sm:$0xff]
          %v816 = vld [vmem:[#allocation2 + $0xe0] sm:$0xff]
          %v817 = vld [vmem:[#allocation2 + $0xe8] sm:$0xff]
          %v818 = vld [vmem:[#allocation2 + $0xf0] sm:$0xff]
          %v819 = vld [vmem:[#allocation2 + $0xf8] sm:$0xff]
          %v820 = vld [vmem:[#allocation8] sm:$0x1]
          %v822 = vlaneseq
          %v823 = vshrl.u32 %v822, 7
          %v824 = vsub.s32 0, %v823
          %v825 = vrot.slane %v820, %v824
          %v827 = vmul.f32 %v788, %v825
          %v828 = vmul.f32 %v789, %v825
          %v829 = vmul.f32 %v790, %v825
          %v830 = vmul.f32 %v791, %v825
          %v831 = vmul.f32 %v792, %v825
          %v832 = vmul.f32 %v793, %v825
          %v833 = vmul.f32 %v794, %v825
          %v834 = vmul.f32 %v795, %v825
          %v835 = vmul.f32 %v796, %v825
          %v836 = vmul.f32 %v797, %v825
          %v837 = vmul.f32 %v798, %v825
          %v838 = vmul.f32 %v799, %v825
          %v839 = vmul.f32 %v800, %v825
          %v840 = vmul.f32 %v801, %v825
          %v841 = vmul.f32 %v802, %v825
          %v842 = vmul.f32 %v803, %v825
          %v843 = vmul.f32 %v804, %v825
          %v844 = vmul.f32 %v805, %v825
          %v845 = vmul.f32 %v806, %v825
          %v846 = vmul.f32 %v807, %v825
          %v847 = vmul.f32 %v808, %v825
          %v848 = vmul.f32 %v809, %v825
          %v849 = vmul.f32 %v810, %v825
          %v850 = vmul.f32 %v811, %v825
          %v851 = vmul.f32 %v812, %v825
          %v852 = vmul.f32 %v813, %v825
          %v853 = vmul.f32 %v814, %v825
          %v854 = vmul.f32 %v815, %v825
          %v855 = vmul.f32 %v816, %v825
          %v856 = vmul.f32 %v817, %v825
          %v857 = vmul.f32 %v818, %v825
          %v858 = vmul.f32 %v819, %v825
          %v859 = vld [vmem:[#allocation9] sm:$0x1]
          %v861 = vlaneseq
          %v862 = vshrl.u32 %v861, 7
          %v863 = vsub.s32 0, %v862
          %v864 = vrot.slane %v859, %v863
          %v866 = vadd.f32 %v827, %v864
          %v867 = vadd.f32 %v828, %v864
          %v868 = vadd.f32 %v829, %v864
          %v869 = vadd.f32 %v830, %v864
          %v870 = vadd.f32 %v831, %v864
          %v871 = vadd.f32 %v832, %v864
          %v872 = vadd.f32 %v833, %v864
          %v873 = vadd.f32 %v834, %v864
          %v874 = vadd.f32 %v835, %v864
          %v875 = vadd.f32 %v836, %v864
          %v876 = vadd.f32 %v837, %v864
          %v877 = vadd.f32 %v838, %v864
          %v878 = vadd.f32 %v839, %v864
          %v879 = vadd.f32 %v840, %v864
          %v880 = vadd.f32 %v841, %v864
          %v881 = vadd.f32 %v842, %v864
          %v882 = vadd.f32 %v843, %v864
          %v883 = vadd.f32 %v844, %v864
          %v884 = vadd.f32 %v845, %v864
          %v885 = vadd.f32 %v846, %v864
          %v886 = vadd.f32 %v847, %v864
          %v887 = vadd.f32 %v848, %v864
          %v888 = vadd.f32 %v849, %v864
          %v889 = vadd.f32 %v850, %v864
          %v890 = vadd.f32 %v851, %v864
          %v891 = vadd.f32 %v852, %v864
          %v892 = vadd.f32 %v853, %v864
          %v893 = vadd.f32 %v854, %v864
          %v894 = vadd.f32 %v855, %v864
          %v895 = vadd.f32 %v856, %v864
          %v896 = vadd.f32 %v857, %v864
          %v897 = vadd.f32 %v858, %v864
          %vm898 = vcmp.ge.f32.partialorder %v866, 0.0
          %vm899 = vcmp.ge.f32.partialorder %v867, 0.0
          %vm900 = vcmp.ge.f32.partialorder %v868, 0.0
          %vm901 = vcmp.ge.f32.partialorder %v869, 0.0
          %vm902 = vcmp.ge.f32.partialorder %v870, 0.0
          %vm903 = vcmp.ge.f32.partialorder %v871, 0.0
          %vm904 = vcmp.ge.f32.partialorder %v872, 0.0
          %vm905 = vcmp.ge.f32.partialorder %v873, 0.0
          %vm906 = vcmp.ge.f32.partialorder %v874, 0.0
          %vm907 = vcmp.ge.f32.partialorder %v875, 0.0
          %vm908 = vcmp.ge.f32.partialorder %v876, 0.0
          %vm909 = vcmp.ge.f32.partialorder %v877, 0.0
          %vm910 = vcmp.ge.f32.partialorder %v878, 0.0
          %vm911 = vcmp.ge.f32.partialorder %v879, 0.0
          %vm912 = vcmp.ge.f32.partialorder %v880, 0.0
          %vm913 = vcmp.ge.f32.partialorder %v881, 0.0
          %vm914 = vcmp.ge.f32.partialorder %v882, 0.0
          %vm915 = vcmp.ge.f32.partialorder %v883, 0.0
          %vm916 = vcmp.ge.f32.partialorder %v884, 0.0
          %vm917 = vcmp.ge.f32.partialorder %v885, 0.0
          %vm918 = vcmp.ge.f32.partialorder %v886, 0.0
          %vm919 = vcmp.ge.f32.partialorder %v887, 0.0
          %vm920 = vcmp.ge.f32.partialorder %v888, 0.0
          %vm921 = vcmp.ge.f32.partialorder %v889, 0.0
          %vm922 = vcmp.ge.f32.partialorder %v890, 0.0
          %vm923 = vcmp.ge.f32.partialorder %v891, 0.0
          %vm924 = vcmp.ge.f32.partialorder %v892, 0.0
          %vm925 = vcmp.ge.f32.partialorder %v893, 0.0
          %vm926 = vcmp.ge.f32.partialorder %v894, 0.0
          %vm927 = vcmp.ge.f32.partialorder %v895, 0.0
          %vm928 = vcmp.ge.f32.partialorder %v896, 0.0
          %vm929 = vcmp.ge.f32.partialorder %v897, 0.0
          %v930 = vmul.f32 %v866, 0.01
          %v931 = vmul.f32 %v867, 0.01
          %v932 = vmul.f32 %v868, 0.01
          %v933 = vmul.f32 %v869, 0.01
          %v934 = vmul.f32 %v870, 0.01
          %v935 = vmul.f32 %v871, 0.01
          %v936 = vmul.f32 %v872, 0.01
          %v937 = vmul.f32 %v873, 0.01
          %v938 = vmul.f32 %v874, 0.01
          %v939 = vmul.f32 %v875, 0.01
          %v940 = vmul.f32 %v876, 0.01
          %v941 = vmul.f32 %v877, 0.01
          %v942 = vmul.f32 %v878, 0.01
          %v943 = vmul.f32 %v879, 0.01
          %v944 = vmul.f32 %v880, 0.01
          %v945 = vmul.f32 %v881, 0.01
          %v946 = vmul.f32 %v882, 0.01
          %v947 = vmul.f32 %v883, 0.01
          %v948 = vmul.f32 %v884, 0.01
          %v949 = vmul.f32 %v885, 0.01
          %v950 = vmul.f32 %v886, 0.01
          %v951 = vmul.f32 %v887, 0.01
          %v952 = vmul.f32 %v888, 0.01
          %v953 = vmul.f32 %v889, 0.01
          %v954 = vmul.f32 %v890, 0.01
          %v955 = vmul.f32 %v891, 0.01
          %v956 = vmul.f32 %v892, 0.01
          %v957 = vmul.f32 %v893, 0.01
          %v958 = vmul.f32 %v894, 0.01
          %v959 = vmul.f32 %v895, 0.01
          %v960 = vmul.f32 %v896, 0.01
          %v961 = vmul.f32 %v897, 0.01
          %v962 = vsel %vm898, %v866, %v930
          %v963 = vsel %vm899, %v867, %v931
          %v964 = vsel %vm900, %v868, %v932
          %v965 = vsel %vm901, %v869, %v933
          %v966 = vsel %vm902, %v870, %v934
          %v967 = vsel %vm903, %v871, %v935
          %v968 = vsel %vm904, %v872, %v936
          %v969 = vsel %vm905, %v873, %v937
          %v970 = vsel %vm906, %v874, %v938
          %v971 = vsel %vm907, %v875, %v939
          %v972 = vsel %vm908, %v876, %v940
          %v973 = vsel %vm909, %v877, %v941
          %v974 = vsel %vm910, %v878, %v942
          %v975 = vsel %vm911, %v879, %v943
          %v976 = vsel %vm912, %v880, %v944
          %v977 = vsel %vm913, %v881, %v945
          %v978 = vsel %vm914, %v882, %v946
          %v979 = vsel %vm915, %v883, %v947
          %v980 = vsel %vm916, %v884, %v948
          %v981 = vsel %vm917, %v885, %v949
          %v982 = vsel %vm918, %v886, %v950
          %v983 = vsel %vm919, %v887, %v951
          %v984 = vsel %vm920, %v888, %v952
          %v985 = vsel %vm921, %v889, %v953
          %v986 = vsel %vm922, %v890, %v954
          %v987 = vsel %vm923, %v891, %v955
          %v988 = vsel %vm924, %v892, %v956
          %v989 = vsel %vm925, %v893, %v957
          %v990 = vsel %vm926, %v894, %v958
          %v991 = vsel %vm927, %v895, %v959
          %v992 = vsel %vm928, %v896, %v960
          %v993 = vsel %vm929, %v897, %v961
          %v994 = vpack.c.bf16 %v963, %v962
          %v995 = vpack.c.bf16 %v965, %v964
          %v996 = vpack.c.bf16 %v967, %v966
          %v997 = vpack.c.bf16 %v969, %v968
          %v998 = vpack.c.bf16 %v971, %v970
          %v999 = vpack.c.bf16 %v973, %v972
          %v1000 = vpack.c.bf16 %v975, %v974
          %v1001 = vpack.c.bf16 %v977, %v976
          %v1002 = vpack.c.bf16 %v979, %v978
          %v1003 = vpack.c.bf16 %v981, %v980
          %v1004 = vpack.c.bf16 %v983, %v982
          %v1005 = vpack.c.bf16 %v985, %v984
          %v1006 = vpack.c.bf16 %v987, %v986
          %v1007 = vpack.c.bf16 %v989, %v988
          %v1008 = vpack.c.bf16 %v991, %v990
          %v1009 = vpack.c.bf16 %v993, %v992
          %v1026 = vunpack.c.l.b16 %v994
          %v1027 = vunpack.c.h.b16 %v994
          %v1028 = vunpack.c.l.b16 %v995
          %v1029 = vunpack.c.h.b16 %v995
          %v1030 = vunpack.c.l.b16 %v996
          %v1031 = vunpack.c.h.b16 %v996
          %v1032 = vunpack.c.l.b16 %v997
          %v1033 = vunpack.c.h.b16 %v997
          %v1034 = vunpack.c.l.b16 %v998
          %v1035 = vunpack.c.h.b16 %v998
          %v1036 = vunpack.c.l.b16 %v999
          %v1037 = vunpack.c.h.b16 %v999
          %v1038 = vunpack.c.l.b16 %v1000
          %v1039 = vunpack.c.h.b16 %v1000
          %v1040 = vunpack.c.l.b16 %v1001
          %v1041 = vunpack.c.h.b16 %v1001
          %v1042 = vunpack.c.l.b16 %v1002
          %v1043 = vunpack.c.h.b16 %v1002
          %v1044 = vunpack.c.l.b16 %v1003
          %v1045 = vunpack.c.h.b16 %v1003
          %v1046 = vunpack.c.l.b16 %v1004
          %v1047 = vunpack.c.h.b16 %v1004
          %v1048 = vunpack.c.l.b16 %v1005
          %v1049 = vunpack.c.h.b16 %v1005
          %v1050 = vunpack.c.l.b16 %v1006
          %v1051 = vunpack.c.h.b16 %v1006
          %v1052 = vunpack.c.l.b16 %v1007
          %v1053 = vunpack.c.h.b16 %v1007
          %v1054 = vunpack.c.l.b16 %v1008
          %v1055 = vunpack.c.h.b16 %v1008
          %v1056 = vunpack.c.l.b16 %v1009
          %v1057 = vunpack.c.h.b16 %v1009
          %v1058 = vpack.c.b16 %v1026, %v1026
          %v1059 = vpack.c.b16 %v1027, %v1027
          %v1060 = vpack.c.b16 %v1028, %v1028
          %v1061 = vpack.c.b16 %v1029, %v1029
          %v1062 = vpack.c.b16 %v1030, %v1030
          %v1063 = vpack.c.b16 %v1031, %v1031
          %v1064 = vpack.c.b16 %v1032, %v1032
          %v1065 = vpack.c.b16 %v1033, %v1033
          %v1066 = vpack.c.b16 %v1034, %v1034
          %v1067 = vpack.c.b16 %v1035, %v1035
          %v1068 = vpack.c.b16 %v1036, %v1036
          %v1069 = vpack.c.b16 %v1037, %v1037
          %v1070 = vpack.c.b16 %v1038, %v1038
          %v1071 = vpack.c.b16 %v1039, %v1039
          %v1072 = vpack.c.b16 %v1040, %v1040
          %v1073 = vpack.c.b16 %v1041, %v1041
          %v1074 = vpack.c.b16 %v1042, %v1042
          %v1075 = vpack.c.b16 %v1043, %v1043
          %v1076 = vpack.c.b16 %v1044, %v1044
          %v1077 = vpack.c.b16 %v1045, %v1045
          %v1078 = vpack.c.b16 %v1046, %v1046
          %v1079 = vpack.c.b16 %v1047, %v1047
          %v1080 = vpack.c.b16 %v1048, %v1048
          %v1081 = vpack.c.b16 %v1049, %v1049
          %v1082 = vpack.c.b16 %v1050, %v1050
          %v1083 = vpack.c.b16 %v1051, %v1051
          %v1084 = vpack.c.b16 %v1052, %v1052
          %v1085 = vpack.c.b16 %v1053, %v1053
          %v1086 = vpack.c.b16 %v1054, %v1054
          %v1087 = vpack.c.b16 %v1055, %v1055
          %v1088 = vpack.c.b16 %v1056, %v1056
          %v1089 = vpack.c.b16 %v1057, %v1057
          %1122 = vst [vmem:[%s304] sm:$0xf] %v1058
          %1123 = vst [vmem:[%s304 + $0x4] sm:$0xf] %v1059
          %1124 = vst [vmem:[%s304 + $0x8] sm:$0xf] %v1060
          %1125 = vst [vmem:[%s304 + $0xc] sm:$0xf] %v1061
          %1126 = vst [vmem:[%s304 + $0x10] sm:$0xf] %v1062
          %1127 = vst [vmem:[%s304 + $0x14] sm:$0xf] %v1063
          %1128 = vst [vmem:[%s304 + $0x18] sm:$0xf] %v1064
          %1129 = vst [vmem:[%s304 + $0x1c] sm:$0xf] %v1065
          %1130 = vst [vmem:[%s304 + $0x20] sm:$0xf] %v1066
          %1131 = vst [vmem:[%s304 + $0x24] sm:$0xf] %v1067
          %1132 = vst [vmem:[%s304 + $0x28] sm:$0xf] %v1068
          %1133 = vst [vmem:[%s304 + $0x2c] sm:$0xf] %v1069
          %1134 = vst [vmem:[%s304 + $0x30] sm:$0xf] %v1070
          %1135 = vst [vmem:[%s304 + $0x34] sm:$0xf] %v1071
          %1136 = vst [vmem:[%s304 + $0x38] sm:$0xf] %v1072
          %1137 = vst [vmem:[%s304 + $0x3c] sm:$0xf] %v1073
          %1138 = vst [vmem:[%s304 + $0x40] sm:$0xf] %v1074
          %1139 = vst [vmem:[%s304 + $0x44] sm:$0xf] %v1075
          %1140 = vst [vmem:[%s304 + $0x48] sm:$0xf] %v1076
          %1141 = vst [vmem:[%s304 + $0x4c] sm:$0xf] %v1077
          %1142 = vst [vmem:[%s304 + $0x50] sm:$0xf] %v1078
          %1143 = vst [vmem:[%s304 + $0x54] sm:$0xf] %v1079
          %1144 = vst [vmem:[%s304 + $0x58] sm:$0xf] %v1080
          %1145 = vst [vmem:[%s304 + $0x5c] sm:$0xf] %v1081
          %1146 = vst [vmem:[%s304 + $0x60] sm:$0xf] %v1082
          %1147 = vst [vmem:[%s304 + $0x64] sm:$0xf] %v1083
          %1148 = vst [vmem:[%s304 + $0x68] sm:$0xf] %v1084
          %1149 = vst [vmem:[%s304 + $0x6c] sm:$0xf] %v1085
          %1150 = vst [vmem:[%s304 + $0x70] sm:$0xf] %v1086
          %1151 = vst [vmem:[%s304 + $0x74] sm:$0xf] %v1087
          %1152 = vst [vmem:[%s304 + $0x78] sm:$0xf] %v1088
          %1153 = vst [vmem:[%s304 + $0x7c] sm:$0xf] %v1089
        $region60: #{_fused_mm.1} parent=35 // pred_fallthru
          _
        %s1154 = sand.u32 %s160, 1
        %s1155 = scalar_lea.sflag [#allocation5], %s1154
        %s1156 = sand.u32 %s160, 1
        %s1157 = smul.addr %s1156, 128
        %s1158 = scalar_lea.vmem [#allocation11], %s1157
        // Predicated region
        $region61: #{_fused_mm.1} parent=35 // pred_check
          %p1159 = pneg %p170
        $region62: #{_fused_mm.1} parent=35 // pred_check_branch
          %1161 = sbr.rel (%p1159) target = $region64
        $region63: #{_fused_mm.1} parent=35 // pred_region
          %s1162 = smul.u32 32, %s28
          %s1164 = ssub.s32 2048, 2048
          %1165 = vsyncadd %s1155, %s1164
          %s1166 = sadd.s32 %s29, %s1162
          %s1167 = smul.addr %s1166, 64
          %s1168 = scalar_lea.hbm %s4, %s1167
          %s1169 = sshll.u32 %s1158, 4
          %s1170 = int_to_ptr.vmem [resolvable:$true] %s1169
          %1175 = dma.vmem_to_hbm [thread:$0]  %s1170, 2048, %s1168, %s1155, 64, 64, 4
        $region64: #{_fused_mm.1} parent=35 // pred_fallthru
          _
      $region36: #{_fused_mm.1} parent=5 // pred_fallthru
        _
      %p1176 = scmp.le.s32.totalorder 2, %s18
      // Predicated region
      $region65: #{_fused_mm.1} parent=5 // pred_check
        %p1177 = pneg %p1176
      $region66: #{_fused_mm.1} parent=5 // pred_check_branch
        %1179 = sbr.rel (%p1177) target = $region68
      $region67: #{_fused_mm.1} parent=5 // pred_region
        %s1180 = ssub.s32 %s18, 2
        // Predicated region
        $region69: #{_fused_mm.1} parent=67 // pred_check
          %p1181 = pneg %p176
        $region70: #{_fused_mm.1} parent=67 // pred_check_branch
          %1183 = sbr.rel (%p1181) target = $region72
        $region71: #{_fused_mm.1} parent=67 // pred_region
          %s1184 = sand.u32 %s161, 1
          %s1185 = scalar_lea.sflag [#allocation5], %s1184
          %s1186 = sand.u32 %s161, 1
          %s1187 = smul.addr %s1186, 128
          %s1188 = scalar_lea.vmem [#allocation11], %s1187
          %1189 = dma.done %s1185, 2048
        $region72: #{_fused_mm.1} parent=67 // pred_fallthru
          _
      $region68: #{_fused_mm.1} parent=5 // pred_fallthru
        _
    $region6: #{_fused_mm.1} parent=1 // loop_footer
      %s22 = sadd.s32 1, %s18
    $region7: #{_fused_mm.1} parent=1 // loop_footer_branch
      %17 = sbr.rel target = $region3
    $region8: #{_fused_mm.1} parent=1 // loop_exit
      _
    %1190 = vsyncpa [#allocation4], 1
    %s1191 = scalar_lea.sflag [#allocation4], 1
    %1192 = vsyncpa %s1191, 1
    %1193 = vsyncpa [#allocation7], 1
    %1194 = vsyncpa [#allocation10], 1
    %1195 = vsyncpa [#allocation5], 1
    %s1196 = scalar_lea.sflag [#allocation5], 1
    %1197 = vsyncpa %s1196, 1

</llo_original>
